<compile_context>
chip_gen: v5e
topology: v5e:2x2
jax: 0.10.0
libtpu: 0.0.40
codegen_flags: <defaults>
</compile_context>

<pallas_src>
import math

import jax
import jax.numpy as jnp
from jax.experimental import pallas as pl
from jax.experimental.pallas import tpu as pltpu

# ---------------- small BERT config ----------------
VOCAB = 100
TYPE_VOCAB = 2
MAX_POS = 32
HIDDEN = 32
NUM_HEADS = 2
HEAD_DIM = HIDDEN // NUM_HEADS
INTERMEDIATE = 64
NUM_LAYERS = 2
LN_EPS = 1e-12


# ---------------- in-kernel helpers ----------------
def _layernorm(y, gamma, beta):
    # y: (S, H) f32; gamma/beta: (1, H) f32
    mean = jnp.mean(y, axis=-1, keepdims=True)
    var = jnp.mean(jnp.square(y - mean), axis=-1, keepdims=True)
    return (y - mean) * jax.lax.rsqrt(var + LN_EPS) * gamma + beta


def _gelu(x):
    # TODO(synk): BERT uses exact erf-GELU; tanh approximation used here for robust Mosaic lowering.
    return 0.5 * x * (1.0 + jnp.tanh(0.7978845608028654 * (x + 0.044715 * x * x * x)))


# ---------------- fused BERT kernel ----------------
def bert_encoder_kernel(emb_ref, kbias_ref, eg_ref, eb_ref, pw_ref, pb_ref,
                        wqkv_ref, bqkv_ref, wo_ref, bo_ref, ag_ref, ab_ref,
                        w1_ref, b1_ref, w2_ref, b2_ref, fg_ref, fb_ref,
                        enc_ref, pool_ref, h_ref):
    layer = pl.program_id(1)

    # Layer 0: embedding LayerNorm into the resident per-sequence hidden scratch.
    @pl.when(layer == 0)
    def _():
        h_ref[...] = _layernorm(emb_ref[...], eg_ref[...], eb_ref[...])

    x = h_ref[...]                                    # (S, H) f32
    x_bf = x.astype(jnp.bfloat16)

    # ---- multi-head self-attention (head axis leading; no lane slicing) ----
    # Per-head QKV projection: weights pre-arranged (3*NH, H, D) in the wrapper.
    x_b = jnp.broadcast_to(x_bf[None], (3 * NUM_HEADS,) + x_bf.shape)
    qkv = jnp.einsum("hsk,hkd->hsd", x_b, wqkv_ref[0],
                     preferred_element_type=jnp.float32) + bqkv_ref[0]  # (3*NH, S, D) f32
    q = qkv[:NUM_HEADS]
    k = qkv[NUM_HEADS:2 * NUM_HEADS]
    v = qkv[2 * NUM_HEADS:]

    scale = 1.0 / math.sqrt(HEAD_DIM)
    s = jnp.einsum("hqd,hkd->hqk", q.astype(jnp.bfloat16), k.astype(jnp.bfloat16),
                   preferred_element_type=jnp.float32) * scale          # (NH, S, S) f32
    s = s + kbias_ref[...]                       # (1, 1, S) key-padding bias broadcast
    s = s - jnp.max(s, axis=-1, keepdims=True)   # softmax in f32
    p = jnp.exp(s)
    p = p * pl.reciprocal(jnp.sum(p, axis=-1, keepdims=True), approx=True)

    ctx = jnp.einsum("hqk,hkd->hqd", p.astype(jnp.bfloat16), v.astype(jnp.bfloat16),
                     preferred_element_type=jnp.float32)                # (NH, S, D) f32
    # Output projection applied per head ((NH, D, H) weights) then summed over
    # heads — mathematically identical to concat(ctx) @ Wo, no lane concat.
    attn_h = jnp.einsum("hqd,hdo->hqo", ctx.astype(jnp.bfloat16), wo_ref[0],
                        preferred_element_type=jnp.float32)             # (NH, S, H) f32
    attn = jnp.sum(attn_h, axis=0) + bo_ref[0]                          # (S, H) f32
    y = _layernorm(attn + x, ag_ref[0], ab_ref[0])

    # ---- feed-forward (bf16 matmuls, f32 GELU / LN) ----
    mid = _gelu(jnp.dot(y.astype(jnp.bfloat16), w1_ref[0],
                        preferred_element_type=jnp.float32) + b1_ref[0])  # (S, I) f32
    out = jnp.dot(mid.astype(jnp.bfloat16), w2_ref[0],
                  preferred_element_type=jnp.float32) + b2_ref[0]          # (S, H) f32
    new_h = _layernorm(out + y, fg_ref[0], fb_ref[0])

    h_ref[...] = new_h            # carry hidden state to the next layer
    enc_ref[0, 0] = new_h         # per-layer output (encoded_layers)

    # ---- pooler: only on the last layer; CLS row read directly from hidden ----
    @pl.when(layer == NUM_LAYERS - 1)
    def _():
        first = new_h[0:1, :].astype(jnp.bfloat16)                       # (1, H)
        pool_ref[0] = jnp.tanh(
            jnp.dot(first, pw_ref[...], preferred_element_type=jnp.float32)
            + pb_ref[...])


# ---------------- pallas_call wrapper ----------------
def bert_fused(emb2d, key_bias, params):
    BS, H = emb2d.shape
    B = key_bias.shape[0]
    S = BS // B
    L = NUM_LAYERS
    st = params["stacked"]

    def full(a):
        nd = a.ndim
        return pl.BlockSpec(a.shape, lambda b, l, _nd=nd: (0,) * _nd)

    def per_layer(a):
        nd = a.ndim
        return pl.BlockSpec((1,) + a.shape[1:],
                            lambda b, l, _nd=nd: (l,) + (0,) * (_nd - 1))

    stacked_order = ["w_qkv", "b_qkv", "wo", "bo", "attn_ln_g", "attn_ln_b",
                     "w1", "b1", "w2", "b2", "ffn_ln_g", "ffn_ln_b"]
    stacked_args = [st[k] for k in stacked_order]

    grid_spec = pltpu.PrefetchScalarGridSpec(
        num_scalar_prefetch=0,
        grid=(B, L),
        in_specs=[pl.BlockSpec((S, H), lambda b, l: (b, 0)),        # this sequence's embeddings
                  pl.BlockSpec((1, 1, S), lambda b, l: (b, 0, 0)),  # per-sequence key-padding bias
                  full(params["emb_ln_g"]), full(params["emb_ln_b"]),
                  full(params["pool_w"]), full(params["pool_b"])]
                 + [per_layer(a) for a in stacked_args],
        out_specs=[pl.BlockSpec((1, 1, S, H), lambda b, l: (l, b, 0, 0)),
                   pl.BlockSpec((1, 1, H), lambda b, l: (b, 0, 0))],
        scratch_shapes=[pltpu.VMEM((S, H), jnp.float32)],
    )
    return pl.pallas_call(
        bert_encoder_kernel,
        out_shape=(jax.ShapeDtypeStruct((L, B, S, H), jnp.float32),
                   jax.ShapeDtypeStruct((B, 1, H), jnp.float32)),
        grid_spec=grid_spec,
        compiler_params=pltpu.CompilerParams(
            dimension_semantics=("parallel", "arbitrary")),
    )(emb2d, key_bias,
      params["emb_ln_g"], params["emb_ln_b"],
      params["pool_w"], params["pool_b"],
      *stacked_args)


# ---------------- parameter init (synthetic, deterministic) ----------------
def init_params(key):
    std = 0.02
    keys = jax.random.split(key, 4 + 6 * NUM_LAYERS)
    ki = iter(keys)

    def norm(shape):
        return jax.random.normal(next(ki), shape, jnp.float32) * std

    def to_heads(w):
        # (H_in, H_out) -> (NUM_HEADS, H_in, HEAD_DIM): per-head column slices.
        return jnp.transpose(w.reshape(HIDDEN, NUM_HEADS, HEAD_DIM), (1, 0, 2))

    params = {
        "word_emb": norm((VOCAB, HIDDEN)),
        "pos_emb": norm((MAX_POS, HIDDEN)),
        "type_emb": norm((TYPE_VOCAB, HIDDEN)),
        "emb_ln_g": jnp.ones((1, HIDDEN), jnp.float32),
        "emb_ln_b": jnp.zeros((1, HIDDEN), jnp.float32),
        "pool_w": norm((HIDDEN, HIDDEN)).astype(jnp.bfloat16),
        "pool_b": jnp.zeros((1, HIDDEN), jnp.float32),
    }
    layers = []
    for _ in range(NUM_LAYERS):
        wq, wk, wv = norm((HIDDEN, HIDDEN)), norm((HIDDEN, HIDDEN)), norm((HIDDEN, HIDDEN))
        wo = norm((HIDDEN, HIDDEN))
        layers.append({
            # Per-head weight layouts prepared HERE (plain JAX, free) so the
            # kernel never lane-slices activations or concatenates heads.
            "w_qkv": jnp.concatenate([to_heads(wq), to_heads(wk), to_heads(wv)],
                                     axis=0).astype(jnp.bfloat16),       # (3*NH, H, D)
            "b_qkv": jnp.zeros((3 * NUM_HEADS, 1, HEAD_DIM), jnp.float32),
            "wo": wo.reshape(NUM_HEADS, HEAD_DIM, HIDDEN).astype(jnp.bfloat16),  # (NH, D, H)
            "bo": jnp.zeros((1, HIDDEN), jnp.float32),
            "attn_ln_g": jnp.ones((1, HIDDEN), jnp.float32),
            "attn_ln_b": jnp.zeros((1, HIDDEN), jnp.float32),
            "w1": norm((HIDDEN, INTERMEDIATE)).astype(jnp.bfloat16),
            "b1": jnp.zeros((1, INTERMEDIATE), jnp.float32),
            "w2": norm((INTERMEDIATE, HIDDEN)).astype(jnp.bfloat16),
            "b2": jnp.zeros((1, HIDDEN), jnp.float32),
            "ffn_ln_g": jnp.ones((1, HIDDEN), jnp.float32),
            "ffn_ln_b": jnp.zeros((1, HIDDEN), jnp.float32),
        })
    # Stack per-layer weights -> (L, ...) so the whole encoder runs as one pallas_call.
    params["stacked"] = {k: jnp.stack([lyr[k] for lyr in layers], axis=0) for k in layers[0]}
    return params


# ---------------- BertModule.forward equivalent ----------------
def bert_module_forward(params, token_ids, token_type_ids=None, attention_mask=None):
    """Returns (encoded_layers, pooled_output), like pytorch_pretrained_bert's BertModel
    with output_all_encoded_layers=True (list of per-layer hidden states)."""
    B, S = token_ids.shape
    if token_type_ids is None:
        token_type_ids = jnp.zeros_like(token_ids)
    if attention_mask is None:
        attention_mask = jnp.ones((B, S), jnp.float32)

    # glue: embedding gathers (word + position + token-type)
    emb_sum = (jnp.take(params["word_emb"], token_ids, axis=0)
               + params["pos_emb"][None, :S, :]
               + jnp.take(params["type_emb"], token_type_ids, axis=0))
    emb2d = emb_sum.reshape(B * S, HIDDEN)

    # Per-sequence additive key-padding bias (HF convention: (1 - mask) * -10000).
    # Attention is computed per sequence inside the kernel, so no block-diagonal
    # cross-sequence mask is needed.
    key_bias = ((1.0 - attention_mask.astype(jnp.float32)) * -10000.0).reshape(B, 1, S)

    enc, pooled = bert_fused(emb2d, key_bias, params)   # (L,B,S,H), (B,1,H)
    encoded_layers = [enc[l] for l in range(NUM_LAYERS)]
    return encoded_layers, pooled.reshape(B, HIDDEN)


if __name__ == "__main__":
    key = jax.random.PRNGKey(0)
    pkey, dkey = jax.random.split(key)
    params = init_params(pkey)

    B, S = 2, 8
    token_ids = jax.random.randint(dkey, (B, S), 0, VOCAB, dtype=jnp.int32)
    attention_mask = jnp.ones((B, S), jnp.float32).at[1, 6:].set(0.0)  # pad last 2 of row 1

    encoded_layers, pooled_output = bert_module_forward(
        params, token_ids, token_type_ids=None, attention_mask=attention_mask)

    jax.block_until_ready(encoded_layers)
    jax.block_until_ready(pooled_output)

    assert len(encoded_layers) == NUM_LAYERS
    assert encoded_layers[-1].shape == (B, S, HIDDEN)
    assert pooled_output.shape == (B, HIDDEN)
    assert bool(jnp.all(jnp.isfinite(encoded_layers[-1])))
    assert bool(jnp.all(jnp.isfinite(pooled_output)))
    print("KERNEL_OK")
</pallas_src>

<mosaic_0001>
module attributes {stable_mosaic.version = 11 : i64} {
  func.func @bert_encoder_kernel(%arg0: i32, %arg1: i32, %arg2: memref<8x32xf32, #tpu.memory_space<vmem>>, %arg3: memref<1x1x8xf32, #tpu.memory_space<vmem>>, %arg4: memref<1x32xf32, #tpu.memory_space<vmem>>, %arg5: memref<1x32xf32, #tpu.memory_space<vmem>>, %arg6: memref<32x32xbf16, #tpu.memory_space<vmem>>, %arg7: memref<1x32xf32, #tpu.memory_space<vmem>>, %arg8: memref<1x6x32x16xbf16, #tpu.memory_space<vmem>>, %arg9: memref<1x6x1x16xf32, #tpu.memory_space<vmem>>, %arg10: memref<1x2x16x32xbf16, #tpu.memory_space<vmem>>, %arg11: memref<1x1x32xf32, #tpu.memory_space<vmem>>, %arg12: memref<1x1x32xf32, #tpu.memory_space<vmem>>, %arg13: memref<1x1x32xf32, #tpu.memory_space<vmem>>, %arg14: memref<1x32x64xbf16, #tpu.memory_space<vmem>>, %arg15: memref<1x1x64xf32, #tpu.memory_space<vmem>>, %arg16: memref<1x64x32xbf16, #tpu.memory_space<vmem>>, %arg17: memref<1x1x32xf32, #tpu.memory_space<vmem>>, %arg18: memref<1x1x32xf32, #tpu.memory_space<vmem>>, %arg19: memref<1x1x32xf32, #tpu.memory_space<vmem>>, %arg20: memref<1x1x8x32xf32, #tpu.memory_space<vmem>>, %arg21: memref<1x1x32xf32, #tpu.memory_space<vmem>>, %arg22: memref<8x32xf32, #tpu.memory_space<vmem>>) attributes {dimension_semantics = [#tpu.dimension_semantics<parallel>, #tpu.dimension_semantics<arbitrary>], iteration_bounds = array<i64: 2, 2>, scalar_prefetch = 0 : i64, scratch_operands = 1 : i64, tpu.core_type = #tpu.core_type<tc>, window_params = [{transform_indices = @transform_0, window_bounds = array<i64: 8, 32>}, {transform_indices = @transform_1, window_bounds = array<i64: 1, 1, 8>}, {pipeline_mode = #tpu.pipeline_mode<synchronous>, transform_indices = @transform_2, window_bounds = array<i64: 1, 32>}, {pipeline_mode = #tpu.pipeline_mode<synchronous>, transform_indices = @transform_3, window_bounds = array<i64: 1, 32>}, {pipeline_mode = #tpu.pipeline_mode<synchronous>, transform_indices = @transform_4, window_bounds = array<i64: 32, 32>}, {pipeline_mode = #tpu.pipeline_mode<synchronous>, transform_indices = @transform_5, window_bounds = array<i64: 1, 32>}, {transform_indices = @transform_6, window_bounds = array<i64: 1, 6, 32, 16>}, {transform_indices = @transform_7, window_bounds = array<i64: 1, 6, 1, 16>}, {transform_indices = @transform_8, window_bounds = array<i64: 1, 2, 16, 32>}, {transform_indices = @transform_9, window_bounds = array<i64: 1, 1, 32>}, {transform_indices = @transform_10, window_bounds = array<i64: 1, 1, 32>}, {transform_indices = @transform_11, window_bounds = array<i64: 1, 1, 32>}, {transform_indices = @transform_12, window_bounds = array<i64: 1, 32, 64>}, {transform_indices = @transform_13, window_bounds = array<i64: 1, 1, 64>}, {transform_indices = @transform_14, window_bounds = array<i64: 1, 64, 32>}, {transform_indices = @transform_15, window_bounds = array<i64: 1, 1, 32>}, {transform_indices = @transform_16, window_bounds = array<i64: 1, 1, 32>}, {transform_indices = @transform_17, window_bounds = array<i64: 1, 1, 32>}, {transform_indices = @transform_18, window_bounds = array<i64: 1, 1, 8, 32>}, {transform_indices = @transform_19, window_bounds = array<i64: 1, 1, 32>}]} {
    %c0_i32 = arith.constant 0 : i32
    %0 = arith.cmpi eq, %arg1, %c0_i32 : i32
    %1 = arith.extui %0 : i1 to i32
    %c0_i32_0 = arith.constant 0 : i32
    %2 = arith.cmpi ne, %1, %c0_i32_0 : i32
    scf.if %2 {
      %c0_74 = arith.constant 0 : index
      %c0_75 = arith.constant 0 : index
      %138 = vector.load %arg2[%c0_74, %c0_75] : memref<8x32xf32, #tpu.memory_space<vmem>>, vector<8x32xf32>
      %c0_76 = arith.constant 0 : index
      %c0_77 = arith.constant 0 : index
      %139 = vector.load %arg4[%c0_76, %c0_77] : memref<1x32xf32, #tpu.memory_space<vmem>>, vector<1x32xf32>
      %c0_78 = arith.constant 0 : index
      %c0_79 = arith.constant 0 : index
      %140 = vector.load %arg5[%c0_78, %c0_79] : memref<1x32xf32, #tpu.memory_space<vmem>>, vector<1x32xf32>
      %cst_80 = arith.constant dense<0.000000e+00> : vector<8xf32>
      %141 = vector.multi_reduction <add>, %138, %cst_80 [1] : vector<8x32xf32> to vector<8xf32>
      %142 = vector.shape_cast %141 : vector<8xf32> to vector<8x1xf32>
      %cst_81 = arith.constant 3.200000e+01 : f32
      %143 = vector.broadcast %cst_81 : f32 to vector<8x1xf32>
      %144 = arith.divf %142, %143 : vector<8x1xf32>
      %145 = vector.broadcast %144 : vector<8x1xf32> to vector<8x32xf32>
      %146 = arith.subf %138, %145 : vector<8x32xf32>
      %147 = arith.mulf %146, %146 : vector<8x32xf32>
      %cst_82 = arith.constant dense<0.000000e+00> : vector<8xf32>
      %148 = vector.multi_reduction <add>, %147, %cst_82 [1] : vector<8x32xf32> to vector<8xf32>
      %149 = vector.shape_cast %148 : vector<8xf32> to vector<8x1xf32>
      %cst_83 = arith.constant 3.200000e+01 : f32
      %150 = vector.broadcast %cst_83 : f32 to vector<8x1xf32>
      %151 = arith.divf %149, %150 : vector<8x1xf32>
      %152 = vector.broadcast %144 : vector<8x1xf32> to vector<8x32xf32>
      %153 = arith.subf %138, %152 : vector<8x32xf32>
      %cst_84 = arith.constant 9.99999996E-13 : f32
      %154 = vector.broadcast %cst_84 : f32 to vector<8x1xf32>
      %155 = arith.addf %151, %154 : vector<8x1xf32>
      %156 = math.rsqrt %155 : vector<8x1xf32>
      %157 = vector.broadcast %156 : vector<8x1xf32> to vector<8x32xf32>
      %158 = arith.mulf %153, %157 : vector<8x32xf32>
      %159 = vector.broadcast %139 : vector<1x32xf32> to vector<8x32xf32>
      %160 = arith.mulf %158, %159 : vector<8x32xf32>
      %161 = vector.broadcast %140 : vector<1x32xf32> to vector<8x32xf32>
      %162 = arith.addf %160, %161 : vector<8x32xf32>
      %c0_85 = arith.constant 0 : index
      %c0_86 = arith.constant 0 : index
      %163 = vector.load %arg22[%c0_85, %c0_86] : memref<8x32xf32, #tpu.memory_space<vmem>>, vector<8x32xf32>
      tpu.vector_store %arg22[%c0_85, %c0_86], %162 {strides = array<i32>} : memref<8x32xf32, #tpu.memory_space<vmem>>, vector<8x32xf32>,
    } else {
    }
    %c0 = arith.constant 0 : index
    %c0_1 = arith.constant 0 : index
    %3 = vector.load %arg22[%c0, %c0_1] : memref<8x32xf32, #tpu.memory_space<vmem>>, vector<8x32xf32>
    %4 = arith.truncf %3 : vector<8x32xf32> to vector<8x32xbf16>
    %5 = vector.shape_cast %4 : vector<8x32xbf16> to vector<1x8x32xbf16>
    %6 = vector.shape_cast %5 : vector<1x8x32xbf16> to vector<1x8x32xbf16>
    %7 = vector.broadcast %6 : vector<1x8x32xbf16> to vector<6x8x32xbf16>
    %c0_2 = arith.constant 0 : index
    %c0_3 = arith.constant 0 : index
    %c0_4 = arith.constant 0 : index
    %c0_5 = arith.constant 0 : index
    %8 = vector.load %arg8[%c0_2, %c0_3, %c0_4, %c0_5] : memref<1x6x32x16xbf16, #tpu.memory_space<vmem>>, vector<1x6x32x16xbf16>
    %9 = vector.shape_cast %8 : vector<1x6x32x16xbf16> to vector<6x32x16xbf16>
    "tpu.trace_start"() <{level = 10 : i32, message = "hsk,hkd->hsd"}> : () -> ()
    %cst = arith.constant dense<0.000000e+00> : vector<6x8x16xf32>
    %10 = tpu.matmul %7, %9, %cst {dimension_numbers = #tpu.dot_dimension_numbers<[2], [1], [1], [2], [0, 0, 0, 1, 1, 2], [0], [0]>} : vector<6x8x32xbf16>, vector<6x32x16xbf16>, vector<6x8x16xf32> -> vector<6x8x16xf32>
    "tpu.trace_stop"() : () -> ()
    %c0_6 = arith.constant 0 : index
    %c0_7 = arith.constant 0 : index
    %c0_8 = arith.constant 0 : index
    %c0_9 = arith.constant 0 : index
    %11 = vector.load %arg9[%c0_6, %c0_7, %c0_8, %c0_9] : memref<1x6x1x16xf32, #tpu.memory_space<vmem>>, vector<1x6x1x16xf32>
    %12 = vector.shape_cast %11 : vector<1x6x1x16xf32> to vector<6x1x16xf32>
    %13 = vector.broadcast %12 : vector<6x1x16xf32> to vector<6x8x16xf32>
    %14 = arith.addf %10, %13 : vector<6x8x16xf32>
    %15 = vector.extract_strided_slice %14 {offsets = [0, 0, 0], sizes = [2, 8, 16], strides = [1, 1, 1]} : vector<6x8x16xf32> to vector<2x8x16xf32>
    %16 = vector.extract_strided_slice %14 {offsets = [2, 0, 0], sizes = [2, 8, 16], strides = [1, 1, 1]} : vector<6x8x16xf32> to vector<2x8x16xf32>
    %17 = vector.extract_strided_slice %14 {offsets = [4, 0, 0], sizes = [2, 8, 16], strides = [1, 1, 1]} : vector<6x8x16xf32> to vector<2x8x16xf32>
    %18 = arith.truncf %15 : vector<2x8x16xf32> to vector<2x8x16xbf16>
    %19 = arith.truncf %16 : vector<2x8x16xf32> to vector<2x8x16xbf16>
    "tpu.trace_start"() <{level = 10 : i32, message = "hqd,hkd->hqk"}> : () -> ()
    %cst_10 = arith.constant dense<0.000000e+00> : vector<2x8x8xf32>
    %20 = tpu.matmul %18, %19, %cst_10 {dimension_numbers = #tpu.dot_dimension_numbers<[2], [2], [1], [1], [0, 0, 0, 1, 1, 1], [0], [0]>} : vector<2x8x16xbf16>, vector<2x8x16xbf16>, vector<2x8x8xf32> -> vector<2x8x8xf32>
    "tpu.trace_stop"() : () -> ()
    %cst_11 = arith.constant 2.500000e-01 : f32
    %21 = vector.broadcast %cst_11 : f32 to vector<2x8x8xf32>
    %22 = arith.mulf %20, %21 : vector<2x8x8xf32>
    %c0_12 = arith.constant 0 : index
    %c0_13 = arith.constant 0 : index
    %c0_14 = arith.constant 0 : index
    %23 = vector.load %arg3[%c0_12, %c0_13, %c0_14] : memref<1x1x8xf32, #tpu.memory_space<vmem>>, vector<1x1x8xf32>
    %24 = vector.broadcast %23 : vector<1x1x8xf32> to vector<2x8x8xf32>
    %25 = arith.addf %22, %24 : vector<2x8x8xf32>
    %cst_15 = arith.constant dense<0xFF800000> : vector<2x8xf32>
    %26 = vector.multi_reduction <maximumf>, %25, %cst_15 [2] : vector<2x8x8xf32> to vector<2x8xf32>
    %27 = vector.shape_cast %26 : vector<2x8xf32> to vector<2x8x1xf32>
    %28 = vector.broadcast %27 : vector<2x8x1xf32> to vector<2x8x8xf32>
    %29 = arith.subf %25, %28 : vector<2x8x8xf32>
    %30 = math.exp %29 : vector<2x8x8xf32>
    %cst_16 = arith.constant dense<0.000000e+00> : vector<2x8xf32>
    %31 = vector.multi_reduction <add>, %30, %cst_16 [2] : vector<2x8x8xf32> to vector<2x8xf32>
    %32 = vector.shape_cast %31 : vector<2x8xf32> to vector<2x8x1xf32>
    %33 = tpu.reciprocal %32 {approx = true} : vector<2x8x1xf32> -> vector<2x8x1xf32>
    %34 = vector.broadcast %33 : vector<2x8x1xf32> to vector<2x8x8xf32>
    %35 = arith.mulf %30, %34 : vector<2x8x8xf32>
    %36 = arith.truncf %35 : vector<2x8x8xf32> to vector<2x8x8xbf16>
    %37 = arith.truncf %17 : vector<2x8x16xf32> to vector<2x8x16xbf16>
    "tpu.trace_start"() <{level = 10 : i32, message = "hqk,hkd->hqd"}> : () -> ()
    %cst_17 = arith.constant dense<0.000000e+00> : vector<2x8x16xf32>
    %38 = tpu.matmul %36, %37, %cst_17 {dimension_numbers = #tpu.dot_dimension_numbers<[2], [1], [1], [2], [0, 0, 0, 1, 1, 2], [0], [0]>} : vector<2x8x8xbf16>, vector<2x8x16xbf16>, vector<2x8x16xf32> -> vector<2x8x16xf32>
    "tpu.trace_stop"() : () -> ()
    %39 = arith.truncf %38 : vector<2x8x16xf32> to vector<2x8x16xbf16>
    %c0_18 = arith.constant 0 : index
    %c0_19 = arith.constant 0 : index
    %c0_20 = arith.constant 0 : index
    %c0_21 = arith.constant 0 : index
    %40 = vector.load %arg10[%c0_18, %c0_19, %c0_20, %c0_21] : memref<1x2x16x32xbf16, #tpu.memory_space<vmem>>, vector<1x2x16x32xbf16>
    %41 = vector.shape_cast %40 : vector<1x2x16x32xbf16> to vector<2x16x32xbf16>
    "tpu.trace_start"() <{level = 10 : i32, message = "hqd,hdo->hqo"}> : () -> ()
    %cst_22 = arith.constant dense<0.000000e+00> : vector<2x8x32xf32>
    %42 = tpu.matmul %39, %41, %cst_22 {dimension_numbers = #tpu.dot_dimension_numbers<[2], [1], [1], [2], [0, 0, 0, 1, 1, 2], [0], [0]>} : vector<2x8x16xbf16>, vector<2x16x32xbf16>, vector<2x8x32xf32> -> vector<2x8x32xf32>
    "tpu.trace_stop"() : () -> ()
    %cst_23 = arith.constant dense<0.000000e+00> : vector<8x32xf32>
    %43 = vector.multi_reduction <add>, %42, %cst_23 [0] : vector<2x8x32xf32> to vector<8x32xf32>
    %c0_24 = arith.constant 0 : index
    %c0_25 = arith.constant 0 : index
    %c0_26 = arith.constant 0 : index
    %44 = vector.load %arg11[%c0_24, %c0_25, %c0_26] : memref<1x1x32xf32, #tpu.memory_space<vmem>>, vector<1x1x32xf32>
    %45 = vector.shape_cast %44 : vector<1x1x32xf32> to vector<1x32xf32>
    %46 = vector.broadcast %45 : vector<1x32xf32> to vector<8x32xf32>
    %47 = arith.addf %43, %46 : vector<8x32xf32>
    %48 = arith.addf %47, %3 : vector<8x32xf32>
    %c0_27 = arith.constant 0 : index
    %c0_28 = arith.constant 0 : index
    %c0_29 = arith.constant 0 : index
    %49 = vector.load %arg12[%c0_27, %c0_28, %c0_29] : memref<1x1x32xf32, #tpu.memory_space<vmem>>, vector<1x1x32xf32>
    %50 = vector.shape_cast %49 : vector<1x1x32xf32> to vector<1x32xf32>
    %c0_30 = arith.constant 0 : index
    %c0_31 = arith.constant 0 : index
    %c0_32 = arith.constant 0 : index
    %51 = vector.load %arg13[%c0_30, %c0_31, %c0_32] : memref<1x1x32xf32, #tpu.memory_space<vmem>>, vector<1x1x32xf32>
    %52 = vector.shape_cast %51 : vector<1x1x32xf32> to vector<1x32xf32>
    %cst_33 = arith.constant dense<0.000000e+00> : vector<8xf32>
    %53 = vector.multi_reduction <add>, %48, %cst_33 [1] : vector<8x32xf32> to vector<8xf32>
    %54 = vector.shape_cast %53 : vector<8xf32> to vector<8x1xf32>
    %cst_34 = arith.constant 3.200000e+01 : f32
    %55 = vector.broadcast %cst_34 : f32 to vector<8x1xf32>
    %56 = arith.divf %54, %55 : vector<8x1xf32>
    %57 = vector.broadcast %56 : vector<8x1xf32> to vector<8x32xf32>
    %58 = arith.subf %48, %57 : vector<8x32xf32>
    %59 = arith.mulf %58, %58 : vector<8x32xf32>
    %cst_35 = arith.constant dense<0.000000e+00> : vector<8xf32>
    %60 = vector.multi_reduction <add>, %59, %cst_35 [1] : vector<8x32xf32> to vector<8xf32>
    %61 = vector.shape_cast %60 : vector<8xf32> to vector<8x1xf32>
    %cst_36 = arith.constant 3.200000e+01 : f32
    %62 = vector.broadcast %cst_36 : f32 to vector<8x1xf32>
    %63 = arith.divf %61, %62 : vector<8x1xf32>
    %64 = vector.broadcast %56 : vector<8x1xf32> to vector<8x32xf32>
    %65 = arith.subf %48, %64 : vector<8x32xf32>
    %cst_37 = arith.constant 9.99999996E-13 : f32
    %66 = vector.broadcast %cst_37 : f32 to vector<8x1xf32>
    %67 = arith.addf %63, %66 : vector<8x1xf32>
    %68 = math.rsqrt %67 : vector<8x1xf32>
    %69 = vector.broadcast %68 : vector<8x1xf32> to vector<8x32xf32>
    %70 = arith.mulf %65, %69 : vector<8x32xf32>
    %71 = vector.broadcast %50 : vector<1x32xf32> to vector<8x32xf32>
    %72 = arith.mulf %70, %71 : vector<8x32xf32>
    %73 = vector.broadcast %52 : vector<1x32xf32> to vector<8x32xf32>
    %74 = arith.addf %72, %73 : vector<8x32xf32>
    %75 = arith.truncf %74 : vector<8x32xf32> to vector<8x32xbf16>
    %c0_38 = arith.constant 0 : index
    %c0_39 = arith.constant 0 : index
    %c0_40 = arith.constant 0 : index
    %76 = vector.load %arg14[%c0_38, %c0_39, %c0_40] : memref<1x32x64xbf16, #tpu.memory_space<vmem>>, vector<1x32x64xbf16>
    %77 = vector.shape_cast %76 : vector<1x32x64xbf16> to vector<32x64xbf16>
    %cst_41 = arith.constant dense<0.000000e+00> : vector<8x64xf32>
    %78 = tpu.matmul %75, %77, %cst_41 {dimension_numbers = #tpu.dot_dimension_numbers<[1], [0], [0], [1], [0, 0, 1, 1], [], []>} : vector<8x32xbf16>, vector<32x64xbf16>, vector<8x64xf32> -> vector<8x64xf32>
    %c0_42 = arith.constant 0 : index
    %c0_43 = arith.constant 0 : index
    %c0_44 = arith.constant 0 : index
    %79 = vector.load %arg15[%c0_42, %c0_43, %c0_44] : memref<1x1x64xf32, #tpu.memory_space<vmem>>, vector<1x1x64xf32>
    %80 = vector.shape_cast %79 : vector<1x1x64xf32> to vector<1x64xf32>
    %81 = vector.broadcast %80 : vector<1x64xf32> to vector<8x64xf32>
    %82 = arith.addf %78, %81 : vector<8x64xf32>
    %cst_45 = arith.constant 5.000000e-01 : f32
    %83 = vector.broadcast %cst_45 : f32 to vector<8x64xf32>
    %84 = arith.mulf %83, %82 : vector<8x64xf32>
    %cst_46 = arith.constant 4.471500e-02 : f32
    %85 = vector.broadcast %cst_46 : f32 to vector<8x64xf32>
    %86 = arith.mulf %85, %82 : vector<8x64xf32>
    %87 = arith.mulf %86, %82 : vector<8x64xf32>
    %88 = arith.mulf %87, %82 : vector<8x64xf32>
    %89 = arith.addf %82, %88 : vector<8x64xf32>
    %cst_47 = arith.constant 0.797884583 : f32
    %90 = vector.broadcast %cst_47 : f32 to vector<8x64xf32>
    %91 = arith.mulf %90, %89 : vector<8x64xf32>
    %92 = math.tanh %91 : vector<8x64xf32>
    %cst_48 = arith.constant 1.000000e+00 : f32
    %93 = vector.broadcast %cst_48 : f32 to vector<8x64xf32>
    %94 = arith.addf %93, %92 : vector<8x64xf32>
    %95 = arith.mulf %84, %94 : vector<8x64xf32>
    %96 = arith.truncf %95 : vector<8x64xf32> to vector<8x64xbf16>
    %c0_49 = arith.constant 0 : index
    %c0_50 = arith.constant 0 : index
    %c0_51 = arith.constant 0 : index
    %97 = vector.load %arg16[%c0_49, %c0_50, %c0_51] : memref<1x64x32xbf16, #tpu.memory_space<vmem>>, vector<1x64x32xbf16>
    %98 = vector.shape_cast %97 : vector<1x64x32xbf16> to vector<64x32xbf16>
    %cst_52 = arith.constant dense<0.000000e+00> : vector<8x32xf32>
    %99 = tpu.matmul %96, %98, %cst_52 {dimension_numbers = #tpu.dot_dimension_numbers<[1], [0], [0], [1], [0, 0, 1, 1], [], []>} : vector<8x64xbf16>, vector<64x32xbf16>, vector<8x32xf32> -> vector<8x32xf32>
    %c0_53 = arith.constant 0 : index
    %c0_54 = arith.constant 0 : index
    %c0_55 = arith.constant 0 : index
    %100 = vector.load %arg17[%c0_53, %c0_54, %c0_55] : memref<1x1x32xf32, #tpu.memory_space<vmem>>, vector<1x1x32xf32>
    %101 = vector.shape_cast %100 : vector<1x1x32xf32> to vector<1x32xf32>
    %102 = vector.broadcast %101 : vector<1x32xf32> to vector<8x32xf32>
    %103 = arith.addf %99, %102 : vector<8x32xf32>
    %104 = arith.addf %103, %74 : vector<8x32xf32>
    %c0_56 = arith.constant 0 : index
    %c0_57 = arith.constant 0 : index
    %c0_58 = arith.constant 0 : index
    %105 = vector.load %arg18[%c0_56, %c0_57, %c0_58] : memref<1x1x32xf32, #tpu.memory_space<vmem>>, vector<1x1x32xf32>
    %106 = vector.shape_cast %105 : vector<1x1x32xf32> to vector<1x32xf32>
    %c0_59 = arith.constant 0 : index
    %c0_60 = arith.constant 0 : index
    %c0_61 = arith.constant 0 : index
    %107 = vector.load %arg19[%c0_59, %c0_60, %c0_61] : memref<1x1x32xf32, #tpu.memory_space<vmem>>, vector<1x1x32xf32>
    %108 = vector.shape_cast %107 : vector<1x1x32xf32> to vector<1x32xf32>
    %cst_62 = arith.constant dense<0.000000e+00> : vector<8xf32>
    %109 = vector.multi_reduction <add>, %104, %cst_62 [1] : vector<8x32xf32> to vector<8xf32>
    %110 = vector.shape_cast %109 : vector<8xf32> to vector<8x1xf32>
    %cst_63 = arith.constant 3.200000e+01 : f32
    %111 = vector.broadcast %cst_63 : f32 to vector<8x1xf32>
    %112 = arith.divf %110, %111 : vector<8x1xf32>
    %113 = vector.broadcast %112 : vector<8x1xf32> to vector<8x32xf32>
    %114 = arith.subf %104, %113 : vector<8x32xf32>
    %115 = arith.mulf %114, %114 : vector<8x32xf32>
    %cst_64 = arith.constant dense<0.000000e+00> : vector<8xf32>
    %116 = vector.multi_reduction <add>, %115, %cst_64 [1] : vector<8x32xf32> to vector<8xf32>
    %117 = vector.shape_cast %116 : vector<8xf32> to vector<8x1xf32>
    %cst_65 = arith.constant 3.200000e+01 : f32
    %118 = vector.broadcast %cst_65 : f32 to vector<8x1xf32>
    %119 = arith.divf %117, %118 : vector<8x1xf32>
    %120 = vector.broadcast %112 : vector<8x1xf32> to vector<8x32xf32>
    %121 = arith.subf %104, %120 : vector<8x32xf32>
    %cst_66 = arith.constant 9.99999996E-13 : f32
    %122 = vector.broadcast %cst_66 : f32 to vector<8x1xf32>
    %123 = arith.addf %119, %122 : vector<8x1xf32>
    %124 = math.rsqrt %123 : vector<8x1xf32>
    %125 = vector.broadcast %124 : vector<8x1xf32> to vector<8x32xf32>
    %126 = arith.mulf %121, %125 : vector<8x32xf32>
    %127 = vector.broadcast %106 : vector<1x32xf32> to vector<8x32xf32>
    %128 = arith.mulf %126, %127 : vector<8x32xf32>
    %129 = vector.broadcast %108 : vector<1x32xf32> to vector<8x32xf32>
    %130 = arith.addf %128, %129 : vector<8x32xf32>
    %c0_67 = arith.constant 0 : index
    %c0_68 = arith.constant 0 : index
    %131 = vector.load %arg22[%c0_67, %c0_68] : memref<8x32xf32, #tpu.memory_space<vmem>>, vector<8x32xf32>
    tpu.vector_store %arg22[%c0_67, %c0_68], %130 {strides = array<i32>} : memref<8x32xf32, #tpu.memory_space<vmem>>, vector<8x32xf32>,
    %c0_69 = arith.constant 0 : index
    %c0_70 = arith.constant 0 : index
    %c0_71 = arith.constant 0 : index
    %c0_72 = arith.constant 0 : index
    %132 = vector.load %arg20[%c0_69, %c0_70, %c0_71, %c0_72] : memref<1x1x8x32xf32, #tpu.memory_space<vmem>>, vector<1x1x8x32xf32>
    %133 = vector.shape_cast %132 : vector<1x1x8x32xf32> to vector<8x32xf32>
    %134 = vector.shape_cast %130 : vector<8x32xf32> to vector<1x1x8x32xf32>
    tpu.vector_store %arg20[%c0_69, %c0_70, %c0_71, %c0_72], %134 {strides = array<i32>} : memref<1x1x8x32xf32, #tpu.memory_space<vmem>>, vector<1x1x8x32xf32>,
    %c1_i32 = arith.constant 1 : i32
    %135 = arith.cmpi eq, %arg1, %c1_i32 : i32
    %136 = arith.extui %135 : i1 to i32
    %c0_i32_73 = arith.constant 0 : i32
    %137 = arith.cmpi ne, %136, %c0_i32_73 : i32
    scf.if %137 {
      %138 = vector.extract_strided_slice %130 {offsets = [0, 0], sizes = [1, 32], strides = [1, 1]} : vector<8x32xf32> to vector<1x32xf32>
      %139 = arith.truncf %138 : vector<1x32xf32> to vector<1x32xbf16>
      %c0_74 = arith.constant 0 : index
      %c0_75 = arith.constant 0 : index
      %140 = vector.load %arg6[%c0_74, %c0_75] : memref<32x32xbf16, #tpu.memory_space<vmem>>, vector<32x32xbf16>
      %cst_76 = arith.constant dense<0.000000e+00> : vector<1x32xf32>
      %141 = tpu.matmul %139, %140, %cst_76 {dimension_numbers = #tpu.dot_dimension_numbers<[1], [0], [0], [1], [0, 0, 1, 1], [], []>} : vector<1x32xbf16>, vector<32x32xbf16>, vector<1x32xf32> -> vector<1x32xf32>
      %c0_77 = arith.constant 0 : index
      %c0_78 = arith.constant 0 : index
      %142 = vector.load %arg7[%c0_77, %c0_78] : memref<1x32xf32, #tpu.memory_space<vmem>>, vector<1x32xf32>
      %143 = arith.addf %141, %142 : vector<1x32xf32>
      %144 = math.tanh %143 : vector<1x32xf32>
      %c0_79 = arith.constant 0 : index
      %c0_80 = arith.constant 0 : index
      %c0_81 = arith.constant 0 : index
      %145 = vector.load %arg21[%c0_79, %c0_80, %c0_81] : memref<1x1x32xf32, #tpu.memory_space<vmem>>, vector<1x1x32xf32>
      %146 = vector.shape_cast %145 : vector<1x1x32xf32> to vector<1x32xf32>
      %147 = vector.shape_cast %144 : vector<1x32xf32> to vector<1x1x32xf32>
      tpu.vector_store %arg21[%c0_79, %c0_80, %c0_81], %147 {strides = array<i32>} : memref<1x1x32xf32, #tpu.memory_space<vmem>>, vector<1x1x32xf32>,
    } else {
    }
    return
  }
  func.func @transform_0(%arg0: i32, %arg1: i32) -> (i32, i32) {
    %c0_i32 = arith.constant 0 : i32
    %c0_i32_0 = arith.constant 0 : i32
    return %arg0, %c0_i32 : i32, i32
  }
  func.func @transform_1(%arg0: i32, %arg1: i32) -> (i32, i32, i32) {
    %c0_i32 = arith.constant 0 : i32
    %c0_i32_0 = arith.constant 0 : i32
    %c0_i32_1 = arith.constant 0 : i32
    return %arg0, %c0_i32, %c0_i32_0 : i32, i32, i32
  }
  func.func @transform_2(%arg0: i32, %arg1: i32) -> (i32, i32) {
    %c0_i32 = arith.constant 0 : i32
    %c0_i32_0 = arith.constant 0 : i32
    %c0_i32_1 = arith.constant 0 : i32
    return %c0_i32, %c0_i32_0 : i32, i32
  }
  func.func @transform_3(%arg0: i32, %arg1: i32) -> (i32, i32) {
    %c0_i32 = arith.constant 0 : i32
    %c0_i32_0 = arith.constant 0 : i32
    %c0_i32_1 = arith.constant 0 : i32
    return %c0_i32, %c0_i32_0 : i32, i32
  }
  func.func @transform_4(%arg0: i32, %arg1: i32) -> (i32, i32) {
    %c0_i32 = arith.constant 0 : i32
    %c0_i32_0 = arith.constant 0 : i32
    %c0_i32_1 = arith.constant 0 : i32
    return %c0_i32, %c0_i32_0 : i32, i32
  }
  func.func @transform_5(%arg0: i32, %arg1: i32) -> (i32, i32) {
    %c0_i32 = arith.constant 0 : i32
    %c0_i32_0 = arith.constant 0 : i32
    %c0_i32_1 = arith.constant 0 : i32
    return %c0_i32, %c0_i32_0 : i32, i32
  }
  func.func @transform_6(%arg0: i32, %arg1: i32) -> (i32, i32, i32, i32) {
    %c0_i32 = arith.constant 0 : i32
    %c0_i32_0 = arith.constant 0 : i32
    %c0_i32_1 = arith.constant 0 : i32
    %c0_i32_2 = arith.constant 0 : i32
    return %arg1, %c0_i32, %c0_i32_0, %c0_i32_1 : i32, i32, i32, i32
  }
  func.func @transform_7(%arg0: i32, %arg1: i32) -> (i32, i32, i32, i32) {
    %c0_i32 = arith.constant 0 : i32
    %c0_i32_0 = arith.constant 0 : i32
    %c0_i32_1 = arith.constant 0 : i32
    %c0_i32_2 = arith.constant 0 : i32
    return %arg1, %c0_i32, %c0_i32_0, %c0_i32_1 : i32, i32, i32, i32
  }
  func.func @transform_8(%arg0: i32, %arg1: i32) -> (i32, i32, i32, i32) {
    %c0_i32 = arith.constant 0 : i32
    %c0_i32_0 = arith.constant 0 : i32
    %c0_i32_1 = arith.constant 0 : i32
    %c0_i32_2 = arith.constant 0 : i32
    return %arg1, %c0_i32, %c0_i32_0, %c0_i32_1 : i32, i32, i32, i32
  }
  func.func @transform_9(%arg0: i32, %arg1: i32) -> (i32, i32, i32) {
    %c0_i32 = arith.constant 0 : i32
    %c0_i32_0 = arith.constant 0 : i32
    %c0_i32_1 = arith.constant 0 : i32
    return %arg1, %c0_i32, %c0_i32_0 : i32, i32, i32
  }
  func.func @transform_10(%arg0: i32, %arg1: i32) -> (i32, i32, i32) {
    %c0_i32 = arith.constant 0 : i32
    %c0_i32_0 = arith.constant 0 : i32
    %c0_i32_1 = arith.constant 0 : i32
    return %arg1, %c0_i32, %c0_i32_0 : i32, i32, i32
  }
  func.func @transform_11(%arg0: i32, %arg1: i32) -> (i32, i32, i32) {
    %c0_i32 = arith.constant 0 : i32
    %c0_i32_0 = arith.constant 0 : i32
    %c0_i32_1 = arith.constant 0 : i32
    return %arg1, %c0_i32, %c0_i32_0 : i32, i32, i32
  }
  func.func @transform_12(%arg0: i32, %arg1: i32) -> (i32, i32, i32) {
    %c0_i32 = arith.constant 0 : i32
    %c0_i32_0 = arith.constant 0 : i32
    %c0_i32_1 = arith.constant 0 : i32
    return %arg1, %c0_i32, %c0_i32_0 : i32, i32, i32
  }
  func.func @transform_13(%arg0: i32, %arg1: i32) -> (i32, i32, i32) {
    %c0_i32 = arith.constant 0 : i32
    %c0_i32_0 = arith.constant 0 : i32
    %c0_i32_1 = arith.constant 0 : i32
    return %arg1, %c0_i32, %c0_i32_0 : i32, i32, i32
  }
  func.func @transform_14(%arg0: i32, %arg1: i32) -> (i32, i32, i32) {
    %c0_i32 = arith.constant 0 : i32
    %c0_i32_0 = arith.constant 0 : i32
    %c0_i32_1 = arith.constant 0 : i32
    return %arg1, %c0_i32, %c0_i32_0 : i32, i32, i32
  }
  func.func @transform_15(%arg0: i32, %arg1: i32) -> (i32, i32, i32) {
    %c0_i32 = arith.constant 0 : i32
    %c0_i32_0 = arith.constant 0 : i32
    %c0_i32_1 = arith.constant 0 : i32
    return %arg1, %c0_i32, %c0_i32_0 : i32, i32, i32
  }
  func.func @transform_16(%arg0: i32, %arg1: i32) -> (i32, i32, i32) {
    %c0_i32 = arith.constant 0 : i32
    %c0_i32_0 = arith.constant 0 : i32
    %c0_i32_1 = arith.constant 0 : i32
    return %arg1, %c0_i32, %c0_i32_0 : i32, i32, i32
  }
  func.func @transform_17(%arg0: i32, %arg1: i32) -> (i32, i32, i32) {
    %c0_i32 = arith.constant 0 : i32
    %c0_i32_0 = arith.constant 0 : i32
    %c0_i32_1 = arith.constant 0 : i32
    return %arg1, %c0_i32, %c0_i32_0 : i32, i32, i32
  }
  func.func @transform_18(%arg0: i32, %arg1: i32) -> (i32, i32, i32, i32) {
    %c0_i32 = arith.constant 0 : i32
    %c0_i32_0 = arith.constant 0 : i32
    %c0_i32_1 = arith.constant 0 : i32
    return %arg1, %arg0, %c0_i32, %c0_i32_0 : i32, i32, i32, i32
  }
  func.func @transform_19(%arg0: i32, %arg1: i32) -> (i32, i32, i32) {
    %c0_i32 = arith.constant 0 : i32
    %c0_i32_0 = arith.constant 0 : i32
    %c0_i32_1 = arith.constant 0 : i32
    return %arg0, %c0_i32, %c0_i32_0 : i32, i32, i32
  }
}

</mosaic_0001>

<llo_original>
// kernel: tpu_custom_call.1
$region0: #{tpu_custom_call.1}
  #allocation0 [shape = 'u32[]', space=smem, size = 0x4, offset = 0x4, fixed_abs, tag = 'smem constant byte address 0x4 - core index']
  #allocation1 [shape = 'u32[72,128]{1,0:T(1,128)}', space=vmem, size = 0x9000, scoped, tag = 'internal scratch']
  #allocation2 [shape = 'f32[8,32]{1,0:T(8,128)}', space=vmem, size = 0x1000, scoped, tag = 'scratch operand']
  %s0 = inlined_call_operand.vmem [shape: f32[16,32], index: 0, kind: input, shape index: {}]
  %s1 = inlined_call_operand.vmem [shape: f32[2,1,8], index: 1, kind: input, shape index: {}]
  %s2 = inlined_call_operand.vmem [shape: f32[1,32], index: 2, kind: input, shape index: {}]
  %s3 = inlined_call_operand.vmem [shape: f32[1,32], index: 3, kind: input, shape index: {}]
  %s4 = inlined_call_operand.vmem [shape: bf16[32,32], index: 4, kind: input, shape index: {}]
  %s5 = inlined_call_operand.vmem [shape: f32[1,32], index: 5, kind: input, shape index: {}]
  %s6 = inlined_call_operand.vmem [shape: bf16[2,6,32,16], index: 6, kind: input, shape index: {}]
  %s7 = inlined_call_operand.vmem [shape: f32[2,6,1,16], index: 7, kind: input, shape index: {}]
  %s8 = inlined_call_operand.vmem [shape: bf16[2,2,16,32], index: 8, kind: input, shape index: {}]
  %s9 = inlined_call_operand.vmem [shape: f32[2,1,32], index: 9, kind: input, shape index: {}]
  %s10 = inlined_call_operand.vmem [shape: f32[2,1,32], index: 10, kind: input, shape index: {}]
  %s11 = inlined_call_operand.vmem [shape: f32[2,1,32], index: 11, kind: input, shape index: {}]
  %s12 = inlined_call_operand.vmem [shape: bf16[2,32,64], index: 12, kind: input, shape index: {}]
  %s13 = inlined_call_operand.vmem [shape: f32[2,1,64], index: 13, kind: input, shape index: {}]
  %s14 = inlined_call_operand.vmem [shape: bf16[2,64,32], index: 14, kind: input, shape index: {}]
  %s15 = inlined_call_operand.vmem [shape: f32[2,1,32], index: 15, kind: input, shape index: {}]
  %s16 = inlined_call_operand.vmem [shape: f32[2,1,32], index: 16, kind: input, shape index: {}]
  %s17 = inlined_call_operand.vmem [shape: f32[2,1,32], index: 17, kind: input, shape index: {}]
  %s18 = inlined_call_operand.hbm [shape: f32[2,2,8,32], index: 18, kind: output, shape index: {0}]
  %s19 = inlined_call_operand.hbm [shape: f32[2,1,32], index: 19, kind: output, shape index: {1}]
  %20 = xla_tuple %s18, %s19
  %s21 = sld [smem:[#allocation0]]
  $region121: #{tpu_custom_call.1} parent=0
    _
  %s23 = ssub.s32 1, %s21
  %s24 = scalar_select 0, %s23, %s21
  $region1: #{tpu_custom_call.1} parent=0
    #allocation3 [shape = 'u8[8192]{0}', space=vmem, size = 0x2000, scoped, tag = 'output window, operand 0']
    #allocation4 [shape = 's32[2]{0}', space=sflag, size = 0x8, scoped, tag = 'scoped memory for tpu_custom_call.1']
    #allocation5 [shape = 'u8[1024]{0}', space=vmem, size = 0x400, scoped, tag = 'output window, operand 1']
    #allocation6 [shape = 's32[2]{0}', space=sflag, size = 0x8, scoped, tag = 'scoped memory for tpu_custom_call.1']
    %25 = vsyncpa [#allocation4], 0
    %s26 = scalar_lea.sflag [#allocation4], 1
    %27 = vsyncpa %s26, 0
    %28 = vsyncpa [#allocation6], 0
    %s29 = scalar_lea.sflag [#allocation6], 1
    %30 = vsyncpa %s29, 0
    loop: start=0, step=1, limit=6
    $region2: #{tpu_custom_call.1} parent=1 // loop_pre_header
      _
    $region3: #{tpu_custom_call.1} parent=1 // loop_header
      %s32 = sphi 0, %s36
      %p33 = scmp.ge.s32.totalorder %s32, 6
      %s39 = sphi 0, %s51
      %s40 = sphi 0, %s47
      %s41 = sphi 0, %s39
      %s42 = sphi 0, %s40
      %s43 = sphi 0, %s41
      %s44 = sphi 0, %s42
      %s54 = sphi 0, %s56
      %s57 = sphi 0, %s54
      %s58 = sphi 0, %s57
      %s74 = sphi 0, %s58
      %s80 = sphi 0, %s82
      %s83 = sphi 0, %s80
      %s84 = sphi 0, %s83
      %s100 = sphi 0, %s84
      %s104 = sphi 0, %s104
      %s106 = sphi 0, %s104
      %s107 = sphi 0, %s106
      %s121 = sphi 0, %s107
      %s125 = sphi 0, %s125
      %s127 = sphi 0, %s125
      %s128 = sphi 0, %s127
      %s142 = sphi 0, %s128
      %s146 = sphi 0, %s146
      %s148 = sphi 0, %s146
      %s149 = sphi 0, %s148
      %s163 = sphi 0, %s149
      %s167 = sphi 0, %s167
      %s169 = sphi 0, %s167
      %s170 = sphi 0, %s169
      %s184 = sphi 0, %s170
      %s190 = sphi 0, %s192
      %s193 = sphi 0, %s190
      %s194 = sphi 0, %s193
      %s210 = sphi 0, %s194
      %s216 = sphi 0, %s218
      %s219 = sphi 0, %s216
      %s220 = sphi 0, %s219
      %s236 = sphi 0, %s220
      %s242 = sphi 0, %s244
      %s245 = sphi 0, %s242
      %s246 = sphi 0, %s245
      %s262 = sphi 0, %s246
      %s268 = sphi 0, %s270
      %s271 = sphi 0, %s268
      %s272 = sphi 0, %s271
      %s288 = sphi 0, %s272
      %s294 = sphi 0, %s296
      %s297 = sphi 0, %s294
      %s298 = sphi 0, %s297
      %s314 = sphi 0, %s298
      %s320 = sphi 0, %s322
      %s323 = sphi 0, %s320
      %s324 = sphi 0, %s323
      %s340 = sphi 0, %s324
      %s346 = sphi 0, %s348
      %s349 = sphi 0, %s346
      %s350 = sphi 0, %s349
      %s366 = sphi 0, %s350
      %s372 = sphi 0, %s374
      %s375 = sphi 0, %s372
      %s376 = sphi 0, %s375
      %s392 = sphi 0, %s376
      %s398 = sphi 0, %s400
      %s401 = sphi 0, %s398
      %s402 = sphi 0, %s401
      %s418 = sphi 0, %s402
      %s424 = sphi 0, %s426
      %s427 = sphi 0, %s424
      %s428 = sphi 0, %s427
      %s444 = sphi 0, %s428
      %s450 = sphi 0, %s452
      %s453 = sphi 0, %s450
      %s454 = sphi 0, %s453
      %s470 = sphi 0, %s454
      %s476 = sphi 0, %s478
      %s479 = sphi 0, %s476
      %s480 = sphi 0, %s479
      %s496 = sphi 0, %s480
      %s504 = sphi 0, %s506
      %s507 = sphi 0, %s504
      %s508 = sphi 0, %s507
      %s524 = sphi 0, %s508
      %s530 = sphi 0, %s532
      %s533 = sphi 0, %s530
      %s534 = sphi 0, %s533
      %s550 = sphi 0, %s534
    $region4: #{tpu_custom_call.1} parent=1 // loop_header_branch
      %35 = sbr.rel (%p33) target = $region8
    $region5: #{tpu_custom_call.1} parent=1 // loop_body
      %s37 = ssub.s32 %s32, 1
      %s38 = ssub.s32 %s32, 2
      %s45 = sadd.s32 1, %s40
      %p46 = scmp.ge.s32.totalorder %s45, 2
      %s47 = scalar_select %p46, 0, %s45
      %s48 = sadd.s32 1, %s39
      %s49 = scalar_select %p46, %s48, %s39
      %p50 = scmp.ge.s32.totalorder %s49, 2
      %s51 = scalar_select %p50, 0, %s49
      %s52 = ssub.s32 %s39, %s51
      %p53 = scmp.eq.s32.totalorder %s52, 0
      %s55 = sadd.s32 %s54, 1
      %s56 = scalar_select %p53, %s54, %s55
      %p59 = pneg %p53
      %p60 = scmp.eq.s32.totalorder %s32, 3
      %p61 = por %p59, %p60
      %p62 = scmp.ne.s32.totalorder %s54, %s57
      %p63 = scmp.eq.s32.totalorder %s32, 0
      %p64 = por %p62, %p63
      %p65 = scmp.ne.s32.totalorder %s54, %s57
      %p66 = scmp.eq.s32.totalorder %s37, 3
      %p67 = por %p65, %p66
      %p68 = scmp.ne.s32.totalorder %s57, %s58
      %p69 = scmp.eq.s32.totalorder %s37, 0
      %p70 = por %p68, %p69
      %p71 = scmp.ne.s32.totalorder %s57, %s58
      %p72 = scmp.eq.s32.totalorder %s38, 3
      %p73 = por %p71, %p72
      %p75 = scmp.ne.s32.totalorder %s58, %s74
      %p76 = scmp.eq.s32.totalorder %s38, 0
      %p77 = por %p75, %p76
      %s78 = ssub.s32 %s39, %s51
      %p79 = scmp.eq.s32.totalorder %s78, 0
      %s81 = sadd.s32 %s80, 1
      %s82 = scalar_select %p79, %s80, %s81
      %p85 = pneg %p79
      %p86 = scmp.eq.s32.totalorder %s32, 3
      %p87 = por %p85, %p86
      %p88 = scmp.ne.s32.totalorder %s80, %s83
      %p89 = scmp.eq.s32.totalorder %s32, 0
      %p90 = por %p88, %p89
      %p91 = scmp.ne.s32.totalorder %s80, %s83
      %p92 = scmp.eq.s32.totalorder %s37, 3
      %p93 = por %p91, %p92
      %p94 = scmp.ne.s32.totalorder %s83, %s84
      %p95 = scmp.eq.s32.totalorder %s37, 0
      %p96 = por %p94, %p95
      %p97 = scmp.ne.s32.totalorder %s83, %s84
      %p98 = scmp.eq.s32.totalorder %s38, 3
      %p99 = por %p97, %p98
      %p101 = scmp.ne.s32.totalorder %s84, %s100
      %p102 = scmp.eq.s32.totalorder %s38, 0
      %p103 = por %p101, %p102
      %s105 = sadd.s32 %s104, 1
      %p108 = scmp.eq.s32.totalorder %s32, 3
      %p109 = scmp.ne.s32.totalorder %s104, %s106
      %p110 = scmp.eq.s32.totalorder %s32, 0
      %p111 = por %p109, %p110
      %p112 = scmp.ne.s32.totalorder %s104, %s106
      %p113 = scmp.eq.s32.totalorder %s37, 3
      %p114 = por %p112, %p113
      %p115 = scmp.ne.s32.totalorder %s106, %s107
      %p116 = scmp.eq.s32.totalorder %s37, 0
      %p117 = por %p115, %p116
      %p118 = scmp.ne.s32.totalorder %s106, %s107
      %p119 = scmp.eq.s32.totalorder %s38, 3
      %p120 = por %p118, %p119
      %p122 = scmp.ne.s32.totalorder %s107, %s121
      %p123 = scmp.eq.s32.totalorder %s38, 0
      %p124 = por %p122, %p123
      %s126 = sadd.s32 %s125, 1
      %p129 = scmp.eq.s32.totalorder %s32, 3
      %p130 = scmp.ne.s32.totalorder %s125, %s127
      %p131 = scmp.eq.s32.totalorder %s32, 0
      %p132 = por %p130, %p131
      %p133 = scmp.ne.s32.totalorder %s125, %s127
      %p134 = scmp.eq.s32.totalorder %s37, 3
      %p135 = por %p133, %p134
      %p136 = scmp.ne.s32.totalorder %s127, %s128
      %p137 = scmp.eq.s32.totalorder %s37, 0
      %p138 = por %p136, %p137
      %p139 = scmp.ne.s32.totalorder %s127, %s128
      %p140 = scmp.eq.s32.totalorder %s38, 3
      %p141 = por %p139, %p140
      %p143 = scmp.ne.s32.totalorder %s128, %s142
      %p144 = scmp.eq.s32.totalorder %s38, 0
      %p145 = por %p143, %p144
      %s147 = sadd.s32 %s146, 1
      %p150 = scmp.eq.s32.totalorder %s32, 3
      %p151 = scmp.ne.s32.totalorder %s146, %s148
      %p152 = scmp.eq.s32.totalorder %s32, 0
      %p153 = por %p151, %p152
      %p154 = scmp.ne.s32.totalorder %s146, %s148
      %p155 = scmp.eq.s32.totalorder %s37, 3
      %p156 = por %p154, %p155
      %p157 = scmp.ne.s32.totalorder %s148, %s149
      %p158 = scmp.eq.s32.totalorder %s37, 0
      %p159 = por %p157, %p158
      %p160 = scmp.ne.s32.totalorder %s148, %s149
      %p161 = scmp.eq.s32.totalorder %s38, 3
      %p162 = por %p160, %p161
      %p164 = scmp.ne.s32.totalorder %s149, %s163
      %p165 = scmp.eq.s32.totalorder %s38, 0
      %p166 = por %p164, %p165
      %s168 = sadd.s32 %s167, 1
      %p171 = scmp.eq.s32.totalorder %s32, 3
      %p172 = scmp.ne.s32.totalorder %s167, %s169
      %p173 = scmp.eq.s32.totalorder %s32, 0
      %p174 = por %p172, %p173
      %p175 = scmp.ne.s32.totalorder %s167, %s169
      %p176 = scmp.eq.s32.totalorder %s37, 3
      %p177 = por %p175, %p176
      %p178 = scmp.ne.s32.totalorder %s169, %s170
      %p179 = scmp.eq.s32.totalorder %s37, 0
      %p180 = por %p178, %p179
      %p181 = scmp.ne.s32.totalorder %s169, %s170
      %p182 = scmp.eq.s32.totalorder %s38, 3
      %p183 = por %p181, %p182
      %p185 = scmp.ne.s32.totalorder %s170, %s184
      %p186 = scmp.eq.s32.totalorder %s38, 0
      %p187 = por %p185, %p186
      %s188 = ssub.s32 %s40, %s47
      %p189 = scmp.eq.s32.totalorder %s188, 0
      %s191 = sadd.s32 %s190, 1
      %s192 = scalar_select %p189, %s190, %s191
      %p195 = pneg %p189
      %p196 = scmp.eq.s32.totalorder %s32, 3
      %p197 = por %p195, %p196
      %p198 = scmp.ne.s32.totalorder %s190, %s193
      %p199 = scmp.eq.s32.totalorder %s32, 0
      %p200 = por %p198, %p199
      %p201 = scmp.ne.s32.totalorder %s190, %s193
      %p202 = scmp.eq.s32.totalorder %s37, 3
      %p203 = por %p201, %p202
      %p204 = scmp.ne.s32.totalorder %s193, %s194
      %p205 = scmp.eq.s32.totalorder %s37, 0
      %p206 = por %p204, %p205
      %p207 = scmp.ne.s32.totalorder %s193, %s194
      %p208 = scmp.eq.s32.totalorder %s38, 3
      %p209 = por %p207, %p208
      %p211 = scmp.ne.s32.totalorder %s194, %s210
      %p212 = scmp.eq.s32.totalorder %s38, 0
      %p213 = por %p211, %p212
      %s214 = ssub.s32 %s40, %s47
      %p215 = scmp.eq.s32.totalorder %s214, 0
      %s217 = sadd.s32 %s216, 1
      %s218 = scalar_select %p215, %s216, %s217
      %p221 = pneg %p215
      %p222 = scmp.eq.s32.totalorder %s32, 3
      %p223 = por %p221, %p222
      %p224 = scmp.ne.s32.totalorder %s216, %s219
      %p225 = scmp.eq.s32.totalorder %s32, 0
      %p226 = por %p224, %p225
      %p227 = scmp.ne.s32.totalorder %s216, %s219
      %p228 = scmp.eq.s32.totalorder %s37, 3
      %p229 = por %p227, %p228
      %p230 = scmp.ne.s32.totalorder %s219, %s220
      %p231 = scmp.eq.s32.totalorder %s37, 0
      %p232 = por %p230, %p231
      %p233 = scmp.ne.s32.totalorder %s219, %s220
      %p234 = scmp.eq.s32.totalorder %s38, 3
      %p235 = por %p233, %p234
      %p237 = scmp.ne.s32.totalorder %s220, %s236
      %p238 = scmp.eq.s32.totalorder %s38, 0
      %p239 = por %p237, %p238
      %s240 = ssub.s32 %s40, %s47
      %p241 = scmp.eq.s32.totalorder %s240, 0
      %s243 = sadd.s32 %s242, 1
      %s244 = scalar_select %p241, %s242, %s243
      %p247 = pneg %p241
      %p248 = scmp.eq.s32.totalorder %s32, 3
      %p249 = por %p247, %p248
      %p250 = scmp.ne.s32.totalorder %s242, %s245
      %p251 = scmp.eq.s32.totalorder %s32, 0
      %p252 = por %p250, %p251
      %p253 = scmp.ne.s32.totalorder %s242, %s245
      %p254 = scmp.eq.s32.totalorder %s37, 3
      %p255 = por %p253, %p254
      %p256 = scmp.ne.s32.totalorder %s245, %s246
      %p257 = scmp.eq.s32.totalorder %s37, 0
      %p258 = por %p256, %p257
      %p259 = scmp.ne.s32.totalorder %s245, %s246
      %p260 = scmp.eq.s32.totalorder %s38, 3
      %p261 = por %p259, %p260
      %p263 = scmp.ne.s32.totalorder %s246, %s262
      %p264 = scmp.eq.s32.totalorder %s38, 0
      %p265 = por %p263, %p264
      %s266 = ssub.s32 %s40, %s47
      %p267 = scmp.eq.s32.totalorder %s266, 0
      %s269 = sadd.s32 %s268, 1
      %s270 = scalar_select %p267, %s268, %s269
      %p273 = pneg %p267
      %p274 = scmp.eq.s32.totalorder %s32, 3
      %p275 = por %p273, %p274
      %p276 = scmp.ne.s32.totalorder %s268, %s271
      %p277 = scmp.eq.s32.totalorder %s32, 0
      %p278 = por %p276, %p277
      %p279 = scmp.ne.s32.totalorder %s268, %s271
      %p280 = scmp.eq.s32.totalorder %s37, 3
      %p281 = por %p279, %p280
      %p282 = scmp.ne.s32.totalorder %s271, %s272
      %p283 = scmp.eq.s32.totalorder %s37, 0
      %p284 = por %p282, %p283
      %p285 = scmp.ne.s32.totalorder %s271, %s272
      %p286 = scmp.eq.s32.totalorder %s38, 3
      %p287 = por %p285, %p286
      %p289 = scmp.ne.s32.totalorder %s272, %s288
      %p290 = scmp.eq.s32.totalorder %s38, 0
      %p291 = por %p289, %p290
      %s292 = ssub.s32 %s40, %s47
      %p293 = scmp.eq.s32.totalorder %s292, 0
      %s295 = sadd.s32 %s294, 1
      %s296 = scalar_select %p293, %s294, %s295
      %p299 = pneg %p293
      %p300 = scmp.eq.s32.totalorder %s32, 3
      %p301 = por %p299, %p300
      %p302 = scmp.ne.s32.totalorder %s294, %s297
      %p303 = scmp.eq.s32.totalorder %s32, 0
      %p304 = por %p302, %p303
      %p305 = scmp.ne.s32.totalorder %s294, %s297
      %p306 = scmp.eq.s32.totalorder %s37, 3
      %p307 = por %p305, %p306
      %p308 = scmp.ne.s32.totalorder %s297, %s298
      %p309 = scmp.eq.s32.totalorder %s37, 0
      %p310 = por %p308, %p309
      %p311 = scmp.ne.s32.totalorder %s297, %s298
      %p312 = scmp.eq.s32.totalorder %s38, 3
      %p313 = por %p311, %p312
      %p315 = scmp.ne.s32.totalorder %s298, %s314
      %p316 = scmp.eq.s32.totalorder %s38, 0
      %p317 = por %p315, %p316
      %s318 = ssub.s32 %s40, %s47
      %p319 = scmp.eq.s32.totalorder %s318, 0
      %s321 = sadd.s32 %s320, 1
      %s322 = scalar_select %p319, %s320, %s321
      %p325 = pneg %p319
      %p326 = scmp.eq.s32.totalorder %s32, 3
      %p327 = por %p325, %p326
      %p328 = scmp.ne.s32.totalorder %s320, %s323
      %p329 = scmp.eq.s32.totalorder %s32, 0
      %p330 = por %p328, %p329
      %p331 = scmp.ne.s32.totalorder %s320, %s323
      %p332 = scmp.eq.s32.totalorder %s37, 3
      %p333 = por %p331, %p332
      %p334 = scmp.ne.s32.totalorder %s323, %s324
      %p335 = scmp.eq.s32.totalorder %s37, 0
      %p336 = por %p334, %p335
      %p337 = scmp.ne.s32.totalorder %s323, %s324
      %p338 = scmp.eq.s32.totalorder %s38, 3
      %p339 = por %p337, %p338
      %p341 = scmp.ne.s32.totalorder %s324, %s340
      %p342 = scmp.eq.s32.totalorder %s38, 0
      %p343 = por %p341, %p342
      %s344 = ssub.s32 %s40, %s47
      %p345 = scmp.eq.s32.totalorder %s344, 0
      %s347 = sadd.s32 %s346, 1
      %s348 = scalar_select %p345, %s346, %s347
      %p351 = pneg %p345
      %p352 = scmp.eq.s32.totalorder %s32, 3
      %p353 = por %p351, %p352
      %p354 = scmp.ne.s32.totalorder %s346, %s349
      %p355 = scmp.eq.s32.totalorder %s32, 0
      %p356 = por %p354, %p355
      %p357 = scmp.ne.s32.totalorder %s346, %s349
      %p358 = scmp.eq.s32.totalorder %s37, 3
      %p359 = por %p357, %p358
      %p360 = scmp.ne.s32.totalorder %s349, %s350
      %p361 = scmp.eq.s32.totalorder %s37, 0
      %p362 = por %p360, %p361
      %p363 = scmp.ne.s32.totalorder %s349, %s350
      %p364 = scmp.eq.s32.totalorder %s38, 3
      %p365 = por %p363, %p364
      %p367 = scmp.ne.s32.totalorder %s350, %s366
      %p368 = scmp.eq.s32.totalorder %s38, 0
      %p369 = por %p367, %p368
      %s370 = ssub.s32 %s40, %s47
      %p371 = scmp.eq.s32.totalorder %s370, 0
      %s373 = sadd.s32 %s372, 1
      %s374 = scalar_select %p371, %s372, %s373
      %p377 = pneg %p371
      %p378 = scmp.eq.s32.totalorder %s32, 3
      %p379 = por %p377, %p378
      %p380 = scmp.ne.s32.totalorder %s372, %s375
      %p381 = scmp.eq.s32.totalorder %s32, 0
      %p382 = por %p380, %p381
      %p383 = scmp.ne.s32.totalorder %s372, %s375
      %p384 = scmp.eq.s32.totalorder %s37, 3
      %p385 = por %p383, %p384
      %p386 = scmp.ne.s32.totalorder %s375, %s376
      %p387 = scmp.eq.s32.totalorder %s37, 0
      %p388 = por %p386, %p387
      %p389 = scmp.ne.s32.totalorder %s375, %s376
      %p390 = scmp.eq.s32.totalorder %s38, 3
      %p391 = por %p389, %p390
      %p393 = scmp.ne.s32.totalorder %s376, %s392
      %p394 = scmp.eq.s32.totalorder %s38, 0
      %p395 = por %p393, %p394
      %s396 = ssub.s32 %s40, %s47
      %p397 = scmp.eq.s32.totalorder %s396, 0
      %s399 = sadd.s32 %s398, 1
      %s400 = scalar_select %p397, %s398, %s399
      %p403 = pneg %p397
      %p404 = scmp.eq.s32.totalorder %s32, 3
      %p405 = por %p403, %p404
      %p406 = scmp.ne.s32.totalorder %s398, %s401
      %p407 = scmp.eq.s32.totalorder %s32, 0
      %p408 = por %p406, %p407
      %p409 = scmp.ne.s32.totalorder %s398, %s401
      %p410 = scmp.eq.s32.totalorder %s37, 3
      %p411 = por %p409, %p410
      %p412 = scmp.ne.s32.totalorder %s401, %s402
      %p413 = scmp.eq.s32.totalorder %s37, 0
      %p414 = por %p412, %p413
      %p415 = scmp.ne.s32.totalorder %s401, %s402
      %p416 = scmp.eq.s32.totalorder %s38, 3
      %p417 = por %p415, %p416
      %p419 = scmp.ne.s32.totalorder %s402, %s418
      %p420 = scmp.eq.s32.totalorder %s38, 0
      %p421 = por %p419, %p420
      %s422 = ssub.s32 %s40, %s47
      %p423 = scmp.eq.s32.totalorder %s422, 0
      %s425 = sadd.s32 %s424, 1
      %s426 = scalar_select %p423, %s424, %s425
      %p429 = pneg %p423
      %p430 = scmp.eq.s32.totalorder %s32, 3
      %p431 = por %p429, %p430
      %p432 = scmp.ne.s32.totalorder %s424, %s427
      %p433 = scmp.eq.s32.totalorder %s32, 0
      %p434 = por %p432, %p433
      %p435 = scmp.ne.s32.totalorder %s424, %s427
      %p436 = scmp.eq.s32.totalorder %s37, 3
      %p437 = por %p435, %p436
      %p438 = scmp.ne.s32.totalorder %s427, %s428
      %p439 = scmp.eq.s32.totalorder %s37, 0
      %p440 = por %p438, %p439
      %p441 = scmp.ne.s32.totalorder %s427, %s428
      %p442 = scmp.eq.s32.totalorder %s38, 3
      %p443 = por %p441, %p442
      %p445 = scmp.ne.s32.totalorder %s428, %s444
      %p446 = scmp.eq.s32.totalorder %s38, 0
      %p447 = por %p445, %p446
      %s448 = ssub.s32 %s40, %s47
      %p449 = scmp.eq.s32.totalorder %s448, 0
      %s451 = sadd.s32 %s450, 1
      %s452 = scalar_select %p449, %s450, %s451
      %p455 = pneg %p449
      %p456 = scmp.eq.s32.totalorder %s32, 3
      %p457 = por %p455, %p456
      %p458 = scmp.ne.s32.totalorder %s450, %s453
      %p459 = scmp.eq.s32.totalorder %s32, 0
      %p460 = por %p458, %p459
      %p461 = scmp.ne.s32.totalorder %s450, %s453
      %p462 = scmp.eq.s32.totalorder %s37, 3
      %p463 = por %p461, %p462
      %p464 = scmp.ne.s32.totalorder %s453, %s454
      %p465 = scmp.eq.s32.totalorder %s37, 0
      %p466 = por %p464, %p465
      %p467 = scmp.ne.s32.totalorder %s453, %s454
      %p468 = scmp.eq.s32.totalorder %s38, 3
      %p469 = por %p467, %p468
      %p471 = scmp.ne.s32.totalorder %s454, %s470
      %p472 = scmp.eq.s32.totalorder %s38, 0
      %p473 = por %p471, %p472
      %s474 = ssub.s32 %s40, %s47
      %p475 = scmp.eq.s32.totalorder %s474, 0
      %s477 = sadd.s32 %s476, 1
      %s478 = scalar_select %p475, %s476, %s477
      %p481 = pneg %p475
      %p482 = scmp.eq.s32.totalorder %s32, 3
      %p483 = por %p481, %p482
      %p484 = scmp.ne.s32.totalorder %s476, %s479
      %p485 = scmp.eq.s32.totalorder %s32, 0
      %p486 = por %p484, %p485
      %p487 = scmp.ne.s32.totalorder %s476, %s479
      %p488 = scmp.eq.s32.totalorder %s37, 3
      %p489 = por %p487, %p488
      %p490 = scmp.ne.s32.totalorder %s479, %s480
      %p491 = scmp.eq.s32.totalorder %s37, 0
      %p492 = por %p490, %p491
      %p493 = scmp.ne.s32.totalorder %s479, %s480
      %p494 = scmp.eq.s32.totalorder %s38, 3
      %p495 = por %p493, %p494
      %p497 = scmp.ne.s32.totalorder %s480, %s496
      %p498 = scmp.eq.s32.totalorder %s38, 0
      %p499 = por %p497, %p498
      %s500 = ssub.s32 %s40, %s47
      %s501 = ssub.s32 %s39, %s51
      %s502 = sor.u32 %s500, %s501
      %p503 = scmp.eq.s32.totalorder %s502, 0
      %s505 = sadd.s32 %s504, 1
      %s506 = scalar_select %p503, %s504, %s505
      %p509 = pneg %p503
      %p510 = scmp.eq.s32.totalorder %s32, 3
      %p511 = por %p509, %p510
      %p512 = scmp.ne.s32.totalorder %s504, %s507
      %p513 = scmp.eq.s32.totalorder %s32, 0
      %p514 = por %p512, %p513
      %p515 = scmp.ne.s32.totalorder %s504, %s507
      %p516 = scmp.eq.s32.totalorder %s37, 3
      %p517 = por %p515, %p516
      %p518 = scmp.ne.s32.totalorder %s507, %s508
      %p519 = scmp.eq.s32.totalorder %s37, 0
      %p520 = por %p518, %p519
      %p521 = scmp.ne.s32.totalorder %s507, %s508
      %p522 = scmp.eq.s32.totalorder %s38, 3
      %p523 = por %p521, %p522
      %p525 = scmp.ne.s32.totalorder %s508, %s524
      %p526 = scmp.eq.s32.totalorder %s38, 0
      %p527 = por %p525, %p526
      %s528 = ssub.s32 %s39, %s51
      %p529 = scmp.eq.s32.totalorder %s528, 0
      %s531 = sadd.s32 %s530, 1
      %s532 = scalar_select %p529, %s530, %s531
      %p535 = pneg %p529
      %p536 = scmp.eq.s32.totalorder %s32, 3
      %p537 = por %p535, %p536
      %p538 = scmp.ne.s32.totalorder %s530, %s533
      %p539 = scmp.eq.s32.totalorder %s32, 0
      %p540 = por %p538, %p539
      %p541 = scmp.ne.s32.totalorder %s530, %s533
      %p542 = scmp.eq.s32.totalorder %s37, 3
      %p543 = por %p541, %p542
      %p544 = scmp.ne.s32.totalorder %s533, %s534
      %p545 = scmp.eq.s32.totalorder %s37, 0
      %p546 = por %p544, %p545
      %p547 = scmp.ne.s32.totalorder %s533, %s534
      %p548 = scmp.eq.s32.totalorder %s38, 3
      %p549 = por %p547, %p548
      %p551 = scmp.ne.s32.totalorder %s534, %s550
      %p552 = scmp.eq.s32.totalorder %s38, 0
      %p553 = por %p551, %p552
      %p554 = scmp.le.s32.totalorder 1, %s32
      %p555 = scmp.lt.s32.totalorder %s32, 5
      %p556 = pnand %p554, %p555
      %p557 = pneg %p556
      // Predicated region
      $region9: #{tpu_custom_call.1} parent=5 // pred_check
        _
      $region10: #{tpu_custom_call.1} parent=5 // pred_check_branch
        %559 = sbr.rel (%p556) target = $region12
      $region11: #{tpu_custom_call.1} parent=5 // pred_region
        %s560 = ssub.s32 %s32, 1
        // Predicated region
        $region13: #{tpu_custom_call.1} parent=11 // pred_check
          %p561 = pneg %p117
        $region14: #{tpu_custom_call.1} parent=11 // pred_check_branch
          %563 = sbr.rel (%p561) target = $region16
        $region15: #{tpu_custom_call.1} parent=11 // pred_region
          _
        $region16: #{tpu_custom_call.1} parent=11 // pred_fallthru
          _
        // Predicated region
        $region17: #{tpu_custom_call.1} parent=11 // pred_check
          %p564 = pneg %p138
        $region18: #{tpu_custom_call.1} parent=11 // pred_check_branch
          %566 = sbr.rel (%p564) target = $region20
        $region19: #{tpu_custom_call.1} parent=11 // pred_region
          _
        $region20: #{tpu_custom_call.1} parent=11 // pred_fallthru
          _
        // Predicated region
        $region21: #{tpu_custom_call.1} parent=11 // pred_check
          %p567 = pneg %p159
        $region22: #{tpu_custom_call.1} parent=11 // pred_check_branch
          %569 = sbr.rel (%p567) target = $region24
        $region23: #{tpu_custom_call.1} parent=11 // pred_region
          _
        $region24: #{tpu_custom_call.1} parent=11 // pred_fallthru
          _
        // Predicated region
        $region25: #{tpu_custom_call.1} parent=11 // pred_check
          %p570 = pneg %p180
        $region26: #{tpu_custom_call.1} parent=11 // pred_check_branch
          %572 = sbr.rel (%p570) target = $region28
        $region27: #{tpu_custom_call.1} parent=11 // pred_region
          _
        $region28: #{tpu_custom_call.1} parent=11 // pred_fallthru
          _
      $region12: #{tpu_custom_call.1} parent=5 // pred_fallthru
        _
      %p573 = scmp.lt.s32.totalorder %s32, 4
      // Predicated region
      $region29: #{tpu_custom_call.1} parent=5 // pred_check
        %p574 = pneg %p573
      $region30: #{tpu_custom_call.1} parent=5 // pred_check_branch
        %576 = sbr.rel (%p574) target = $region32
      $region31: #{tpu_custom_call.1} parent=5 // pred_region
        // Predicated region
        $region33: #{tpu_custom_call.1} parent=31 // pred_check
          %p577 = pneg %p64
        $region34: #{tpu_custom_call.1} parent=31 // pred_check_branch
          %579 = sbr.rel (%p577) target = $region36
        $region35: #{tpu_custom_call.1} parent=31 // pred_region
          %p580 = scmp.lt.s32.totalorder %s39, 1
          %s581 = scalar_select %p580, %s39, 1
          %s582 = smul.addr %s581, 8
          %s583 = scalar_lea.vmem %s0, %s582
        $region36: #{tpu_custom_call.1} parent=31 // pred_fallthru
          _
        // Predicated region
        $region37: #{tpu_custom_call.1} parent=31 // pred_check
          %p584 = pneg %p90
        $region38: #{tpu_custom_call.1} parent=31 // pred_check_branch
          %586 = sbr.rel (%p584) target = $region40
        $region39: #{tpu_custom_call.1} parent=31 // pred_region
          %p587 = scmp.lt.s32.totalorder %s39, 1
          %s588 = scalar_select %p587, %s39, 1
          %s589 = scalar_lea.vmem %s1, %s588
        $region40: #{tpu_custom_call.1} parent=31 // pred_fallthru
          _
        // Predicated region
        $region41: #{tpu_custom_call.1} parent=31 // pred_check
          %p590 = pneg %p200
        $region42: #{tpu_custom_call.1} parent=31 // pred_check_branch
          %592 = sbr.rel (%p590) target = $region44
        $region43: #{tpu_custom_call.1} parent=31 // pred_region
          %p593 = scmp.lt.s32.totalorder %s40, 1
          %s594 = scalar_select %p593, %s40, 1
          %s595 = smul.addr %s594, 24
          %s596 = smul.addr %s595, 4
          %s597 = scalar_lea.vmem %s6, %s596
        $region44: #{tpu_custom_call.1} parent=31 // pred_fallthru
          _
        // Predicated region
        $region45: #{tpu_custom_call.1} parent=31 // pred_check
          %p598 = pneg %p226
        $region46: #{tpu_custom_call.1} parent=31 // pred_check_branch
          %600 = sbr.rel (%p598) target = $region48
        $region47: #{tpu_custom_call.1} parent=31 // pred_region
          %p601 = scmp.lt.s32.totalorder %s40, 1
          %s602 = scalar_select %p601, %s40, 1
          %s603 = smul.addr %s602, 6
          %s604 = scalar_lea.vmem %s7, %s603
        $region48: #{tpu_custom_call.1} parent=31 // pred_fallthru
          _
        // Predicated region
        $region49: #{tpu_custom_call.1} parent=31 // pred_check
          %p605 = pneg %p252
        $region50: #{tpu_custom_call.1} parent=31 // pred_check_branch
          %607 = sbr.rel (%p605) target = $region52
        $region51: #{tpu_custom_call.1} parent=31 // pred_region
          %p608 = scmp.lt.s32.totalorder %s40, 1
          %s609 = scalar_select %p608, %s40, 1
          %s610 = smul.addr %s609, 4
          %s611 = smul.addr %s610, 4
          %s612 = scalar_lea.vmem %s8, %s611
        $region52: #{tpu_custom_call.1} parent=31 // pred_fallthru
          _
        // Predicated region
        $region53: #{tpu_custom_call.1} parent=31 // pred_check
          %p613 = pneg %p278
        $region54: #{tpu_custom_call.1} parent=31 // pred_check_branch
          %615 = sbr.rel (%p613) target = $region56
        $region55: #{tpu_custom_call.1} parent=31 // pred_region
          %p616 = scmp.lt.s32.totalorder %s40, 1
          %s617 = scalar_select %p616, %s40, 1
          %s618 = scalar_lea.vmem %s9, %s617
        $region56: #{tpu_custom_call.1} parent=31 // pred_fallthru
          _
        // Predicated region
        $region57: #{tpu_custom_call.1} parent=31 // pred_check
          %p619 = pneg %p304
        $region58: #{tpu_custom_call.1} parent=31 // pred_check_branch
          %621 = sbr.rel (%p619) target = $region60
        $region59: #{tpu_custom_call.1} parent=31 // pred_region
          %p622 = scmp.lt.s32.totalorder %s40, 1
          %s623 = scalar_select %p622, %s40, 1
          %s624 = scalar_lea.vmem %s10, %s623
        $region60: #{tpu_custom_call.1} parent=31 // pred_fallthru
          _
        // Predicated region
        $region61: #{tpu_custom_call.1} parent=31 // pred_check
          %p625 = pneg %p330
        $region62: #{tpu_custom_call.1} parent=31 // pred_check_branch
          %627 = sbr.rel (%p625) target = $region64
        $region63: #{tpu_custom_call.1} parent=31 // pred_region
          %p628 = scmp.lt.s32.totalorder %s40, 1
          %s629 = scalar_select %p628, %s40, 1
          %s630 = scalar_lea.vmem %s11, %s629
        $region64: #{tpu_custom_call.1} parent=31 // pred_fallthru
          _
        // Predicated region
        $region65: #{tpu_custom_call.1} parent=31 // pred_check
          %p631 = pneg %p356
        $region66: #{tpu_custom_call.1} parent=31 // pred_check_branch
          %633 = sbr.rel (%p631) target = $region68
        $region67: #{tpu_custom_call.1} parent=31 // pred_region
          %p634 = scmp.lt.s32.totalorder %s40, 1
          %s635 = scalar_select %p634, %s40, 1
          %s636 = smul.addr %s635, 4
          %s637 = smul.addr %s636, 4
          %s638 = scalar_lea.vmem %s12, %s637
        $region68: #{tpu_custom_call.1} parent=31 // pred_fallthru
          _
        // Predicated region
        $region69: #{tpu_custom_call.1} parent=31 // pred_check
          %p639 = pneg %p382
        $region70: #{tpu_custom_call.1} parent=31 // pred_check_branch
          %641 = sbr.rel (%p639) target = $region72
        $region71: #{tpu_custom_call.1} parent=31 // pred_region
          %p642 = scmp.lt.s32.totalorder %s40, 1
          %s643 = scalar_select %p642, %s40, 1
          %s644 = scalar_lea.vmem %s13, %s643
        $region72: #{tpu_custom_call.1} parent=31 // pred_fallthru
          _
        // Predicated region
        $region73: #{tpu_custom_call.1} parent=31 // pred_check
          %p645 = pneg %p408
        $region74: #{tpu_custom_call.1} parent=31 // pred_check_branch
          %647 = sbr.rel (%p645) target = $region76
        $region75: #{tpu_custom_call.1} parent=31 // pred_region
          %p648 = scmp.lt.s32.totalorder %s40, 1
          %s649 = scalar_select %p648, %s40, 1
          %s650 = smul.addr %s649, 8
          %s651 = smul.addr %s650, 4
          %s652 = scalar_lea.vmem %s14, %s651
        $region76: #{tpu_custom_call.1} parent=31 // pred_fallthru
          _
        // Predicated region
        $region77: #{tpu_custom_call.1} parent=31 // pred_check
          %p653 = pneg %p434
        $region78: #{tpu_custom_call.1} parent=31 // pred_check_branch
          %655 = sbr.rel (%p653) target = $region80
        $region79: #{tpu_custom_call.1} parent=31 // pred_region
          %p656 = scmp.lt.s32.totalorder %s40, 1
          %s657 = scalar_select %p656, %s40, 1
          %s658 = scalar_lea.vmem %s15, %s657
        $region80: #{tpu_custom_call.1} parent=31 // pred_fallthru
          _
        // Predicated region
        $region81: #{tpu_custom_call.1} parent=31 // pred_check
          %p659 = pneg %p460
        $region82: #{tpu_custom_call.1} parent=31 // pred_check_branch
          %661 = sbr.rel (%p659) target = $region84
        $region83: #{tpu_custom_call.1} parent=31 // pred_region
          %p662 = scmp.lt.s32.totalorder %s40, 1
          %s663 = scalar_select %p662, %s40, 1
          %s664 = scalar_lea.vmem %s16, %s663
        $region84: #{tpu_custom_call.1} parent=31 // pred_fallthru
          _
        // Predicated region
        $region85: #{tpu_custom_call.1} parent=31 // pred_check
          %p665 = pneg %p486
        $region86: #{tpu_custom_call.1} parent=31 // pred_check_branch
          %667 = sbr.rel (%p665) target = $region88
        $region87: #{tpu_custom_call.1} parent=31 // pred_region
          %p668 = scmp.lt.s32.totalorder %s40, 1
          %s669 = scalar_select %p668, %s40, 1
          %s670 = scalar_lea.vmem %s17, %s669
        $region88: #{tpu_custom_call.1} parent=31 // pred_fallthru
          _
      $region32: #{tpu_custom_call.1} parent=5 // pred_fallthru
        _
      %p671 = scmp.le.s32.totalorder 1, %s32
      %p672 = scmp.lt.s32.totalorder %s32, 5
      %p673 = pnand %p671, %p672
      %p674 = pneg %p673
      // Predicated region
      $region89: #{tpu_custom_call.1} parent=5 // pred_check
        _
      $region90: #{tpu_custom_call.1} parent=5 // pred_check_branch
        %676 = sbr.rel (%p673) target = $region92
      $region91: #{tpu_custom_call.1} parent=5 // pred_region
        %s677 = ssub.s32 %s32, 1
        %p678 = scmp.lt.s32.totalorder %s41, 1
        %s679 = scalar_select %p678, %s41, 1
        %s680 = smul.addr %s679, 8
        %s681 = scalar_lea.vmem %s0, %s680
        %p682 = pneg %p70
        %p683 = pneg %p67
        %p684 = scmp.lt.s32.totalorder %s41, 1
        %s685 = scalar_select %p684, %s41, 1
        %s686 = scalar_lea.vmem %s1, %s685
        %p687 = pneg %p96
        %p688 = pneg %p93
        %p689 = pneg %p117
        %p690 = pneg %p114
        %p691 = pneg %p138
        %p692 = pneg %p135
        %p693 = pneg %p159
        %p694 = pneg %p156
        %p695 = pneg %p180
        %p696 = pneg %p177
        %p697 = scmp.lt.s32.totalorder %s42, 1
        %s698 = scalar_select %p697, %s42, 1
        %s699 = smul.addr %s698, 24
        %s700 = smul.addr %s699, 4
        %s701 = scalar_lea.vmem %s6, %s700
        %p702 = pneg %p206
        %p703 = pneg %p203
        %p704 = scmp.lt.s32.totalorder %s42, 1
        %s705 = scalar_select %p704, %s42, 1
        %s706 = smul.addr %s705, 6
        %s707 = scalar_lea.vmem %s7, %s706
        %p708 = pneg %p232
        %p709 = pneg %p229
        %p710 = scmp.lt.s32.totalorder %s42, 1
        %s711 = scalar_select %p710, %s42, 1
        %s712 = smul.addr %s711, 4
        %s713 = smul.addr %s712, 4
        %s714 = scalar_lea.vmem %s8, %s713
        %p715 = pneg %p258
        %p716 = pneg %p255
        %p717 = scmp.lt.s32.totalorder %s42, 1
        %s718 = scalar_select %p717, %s42, 1
        %s719 = scalar_lea.vmem %s9, %s718
        %p720 = pneg %p284
        %p721 = pneg %p281
        %p722 = scmp.lt.s32.totalorder %s42, 1
        %s723 = scalar_select %p722, %s42, 1
        %s724 = scalar_lea.vmem %s10, %s723
        %p725 = pneg %p310
        %p726 = pneg %p307
        %p727 = scmp.lt.s32.totalorder %s42, 1
        %s728 = scalar_select %p727, %s42, 1
        %s729 = scalar_lea.vmem %s11, %s728
        %p730 = pneg %p336
        %p731 = pneg %p333
        %p732 = scmp.lt.s32.totalorder %s42, 1
        %s733 = scalar_select %p732, %s42, 1
        %s734 = smul.addr %s733, 4
        %s735 = smul.addr %s734, 4
        %s736 = scalar_lea.vmem %s12, %s735
        %p737 = pneg %p362
        %p738 = pneg %p359
        %p739 = scmp.lt.s32.totalorder %s42, 1
        %s740 = scalar_select %p739, %s42, 1
        %s741 = scalar_lea.vmem %s13, %s740
        %p742 = pneg %p388
        %p743 = pneg %p385
        %p744 = scmp.lt.s32.totalorder %s42, 1
        %s745 = scalar_select %p744, %s42, 1
        %s746 = smul.addr %s745, 8
        %s747 = smul.addr %s746, 4
        %s748 = scalar_lea.vmem %s14, %s747
        %p749 = pneg %p414
        %p750 = pneg %p411
        %p751 = scmp.lt.s32.totalorder %s42, 1
        %s752 = scalar_select %p751, %s42, 1
        %s753 = scalar_lea.vmem %s15, %s752
        %p754 = pneg %p440
        %p755 = pneg %p437
        %p756 = scmp.lt.s32.totalorder %s42, 1
        %s757 = scalar_select %p756, %s42, 1
        %s758 = scalar_lea.vmem %s16, %s757
        %p759 = pneg %p466
        %p760 = pneg %p463
        %p761 = scmp.lt.s32.totalorder %s42, 1
        %s762 = scalar_select %p761, %s42, 1
        %s763 = scalar_lea.vmem %s17, %s762
        %p764 = pneg %p492
        %p765 = pneg %p489
        %p766 = pneg %p520
        %p767 = pneg %p517
        %s768 = sand.u32 %s507, 1
        %s769 = scalar_lea.sflag [#allocation4], %s768
        %s770 = sand.u32 %s507, 1
        %s771 = smul.addr %s770, 8
        %s772 = scalar_lea.vmem [#allocation3], %s771
        %p773 = pneg %p546
        %p774 = pneg %p543
        %s775 = sand.u32 %s533, 1
        %s776 = scalar_lea.sflag [#allocation6], %s775
        %s777 = sand.u32 %s533, 1
        %s778 = scalar_lea.vmem [#allocation5], %s777
        %p779 = scmp.lt.s32.totalorder %s41, 1
        %s780 = scalar_select %p779, %s41, 1
        %s781 = smul.addr %s780, 8
        %s782 = scalar_lea.vmem %s0, %s781
        %p783 = scmp.lt.s32.totalorder %s41, 1
        %s784 = scalar_select %p783, %s41, 1
        %s785 = scalar_lea.vmem %s1, %s784
        %p786 = scmp.lt.s32.totalorder %s42, 1
        %s787 = scalar_select %p786, %s42, 1
        %s788 = smul.addr %s787, 24
        %s789 = smul.addr %s788, 4
        %s790 = scalar_lea.vmem %s6, %s789
        %p791 = scmp.lt.s32.totalorder %s42, 1
        %s792 = scalar_select %p791, %s42, 1
        %s793 = smul.addr %s792, 6
        %s794 = scalar_lea.vmem %s7, %s793
        %p795 = scmp.lt.s32.totalorder %s42, 1
        %s796 = scalar_select %p795, %s42, 1
        %s797 = smul.addr %s796, 4
        %s798 = smul.addr %s797, 4
        %s799 = scalar_lea.vmem %s8, %s798
        %p800 = scmp.lt.s32.totalorder %s42, 1
        %s801 = scalar_select %p800, %s42, 1
        %s802 = scalar_lea.vmem %s9, %s801
        %p803 = scmp.lt.s32.totalorder %s42, 1
        %s804 = scalar_select %p803, %s42, 1
        %s805 = scalar_lea.vmem %s10, %s804
        %p806 = scmp.lt.s32.totalorder %s42, 1
        %s807 = scalar_select %p806, %s42, 1
        %s808 = scalar_lea.vmem %s11, %s807
        %p809 = scmp.lt.s32.totalorder %s42, 1
        %s810 = scalar_select %p809, %s42, 1
        %s811 = smul.addr %s810, 4
        %s812 = smul.addr %s811, 4
        %s813 = scalar_lea.vmem %s12, %s812
        %p814 = scmp.lt.s32.totalorder %s42, 1
        %s815 = scalar_select %p814, %s42, 1
        %s816 = scalar_lea.vmem %s13, %s815
        %p817 = scmp.lt.s32.totalorder %s42, 1
        %s818 = scalar_select %p817, %s42, 1
        %s819 = smul.addr %s818, 8
        %s820 = smul.addr %s819, 4
        %s821 = scalar_lea.vmem %s14, %s820
        %p822 = scmp.lt.s32.totalorder %s42, 1
        %s823 = scalar_select %p822, %s42, 1
        %s824 = scalar_lea.vmem %s15, %s823
        %p825 = scmp.lt.s32.totalorder %s42, 1
        %s826 = scalar_select %p825, %s42, 1
        %s827 = scalar_lea.vmem %s16, %s826
        %p828 = scmp.lt.s32.totalorder %s42, 1
        %s829 = scalar_select %p828, %s42, 1
        %s830 = scalar_lea.vmem %s17, %s829
        %p832 = scmp.eq.s32.totalorder %s42, 0
        // Predicated region
        $region93: #{tpu_custom_call.1} parent=91 // pred_check
          %p833 = pneg %p832
        $region94: #{tpu_custom_call.1} parent=91 // pred_check_branch
          %835 = sbr.rel (%p833) target = $region96
        $region95: #{tpu_custom_call.1} parent=91 // pred_region
          %v836 = vld [vmem:[%s782] sm:$0xff]
          %v837 = vld [vmem:[%s2] sm:$0x1]
          %v838 = vld [vmem:[%s3] sm:$0x1]
          %vm839 = vcmask 261120
          %v840 = vsel %vm839, %v836, 0.0
          %841 = vadd.xlane.f32.xlu0 %v840
          %v842 = vpop.xlane.xlu0 %841
          %v843 = vrcp.pop 32.0
          %v844 = vmul.f32 32.0, %v843
          %v845 = vsub.f32 1.0, %v844
          %v846 = vmul.f32 %v843, %v845
          %v847 = vadd.f32 %v843, %v846
          %vm848 = vweird.f32 %v843
          %v849 = vsel %vm848, %v843, %v847
          %v850 = vmul.f32 %v842, %v849
          %v851 = vsub.f32 %v836, %v850
          %v852 = vmul.f32 %v851, %v851
          %v853 = vsel %vm839, %v852, 0.0
          %854 = vadd.xlane.f32.xlu0 %v853
          %v855 = vpop.xlane.xlu0 %854
          %v856 = vmul.f32 %v855, %v849
          %v857 = vadd.f32 %v856, 1e-12
          %v858 = vrsqrt.pop %v857
          %v859 = vmul.f32 %v858, %v857
          %v860 = vmul.f32 %v859, %v858
          %v861 = vmul.f32 0.5, %v860
          %v862 = vsub.f32 1.5, %v861
          %v863 = vmul.f32 %v858, %v862
          %vm864 = vweird.f32 %v857
          %vm865 = vweird.f32 %v858
          %vm866 = vmor %vm864, %vm865
          %v867 = vsel %vm866, %v858, %v863
          %v868 = vmul.f32 %v851, %v867
          %v870 = vperm.slane %v837, 0
          %v872 = vmul.f32 %v868, %v870
          %v874 = vperm.slane %v838, 0
          %v876 = vadd.f32 %v872, %v874
          %877 = vst.msk [vmem:[#allocation2] sm:$0xff] %vm839, %v876
        $region96: #{tpu_custom_call.1} parent=91 // pred_fallthru
          _
        %v878 = vld [vmem:[#allocation2] sm:$0xff]
        %v879 = vpack.c.bf16 %v878, %v878
        %v880 = vld [vmem:[%s790] sm:$0xf]
        %v881 = vld [vmem:[%s790 + $0x4] sm:$0xf]
        %v882 = vld [vmem:[%s790 + $0x8] sm:$0xf]
        %v883 = vld [vmem:[%s790 + $0xc] sm:$0xf]
        %v884 = vld [vmem:[%s790 + $0x10] sm:$0xf]
        %v885 = vld [vmem:[%s790 + $0x14] sm:$0xf]
        %v886 = vld [vmem:[%s790 + $0x18] sm:$0xf]
        %v887 = vld [vmem:[%s790 + $0x1c] sm:$0xf]
        %v888 = vld [vmem:[%s790 + $0x20] sm:$0xf]
        %v889 = vld [vmem:[%s790 + $0x24] sm:$0xf]
        %v890 = vld [vmem:[%s790 + $0x28] sm:$0xf]
        %v891 = vld [vmem:[%s790 + $0x2c] sm:$0xf]
        %v892 = vld [vmem:[%s790 + $0x30] sm:$0xf]
        %v893 = vld [vmem:[%s790 + $0x34] sm:$0xf]
        %v894 = vld [vmem:[%s790 + $0x38] sm:$0xf]
        %v895 = vld [vmem:[%s790 + $0x3c] sm:$0xf]
        %v896 = vld [vmem:[%s790 + $0x40] sm:$0xf]
        %v897 = vld [vmem:[%s790 + $0x44] sm:$0xf]
        %v898 = vld [vmem:[%s790 + $0x48] sm:$0xf]
        %v899 = vld [vmem:[%s790 + $0x4c] sm:$0xf]
        %v900 = vld [vmem:[%s790 + $0x50] sm:$0xf]
        %v901 = vld [vmem:[%s790 + $0x54] sm:$0xf]
        %v902 = vld [vmem:[%s790 + $0x58] sm:$0xf]
        %v903 = vld [vmem:[%s790 + $0x5c] sm:$0xf]
        %v904 = vld [vmem:[%s794] sm:$0x1]
        %v905 = vld [vmem:[%s794 + $0x1] sm:$0x1]
        %v906 = vld [vmem:[%s794 + $0x2] sm:$0x1]
        %v907 = vld [vmem:[%s794 + $0x3] sm:$0x1]
        %v908 = vld [vmem:[%s794 + $0x4] sm:$0x1]
        %v909 = vld [vmem:[%s794 + $0x5] sm:$0x1]
        %v916 = vperm.slane %v904, 0
        %v917 = vperm.slane %v905, 0
        %v918 = vperm.slane %v906, 0
        %v919 = vperm.slane %v907, 0
        %v920 = vperm.slane %v908, 0
        %v921 = vperm.slane %v909, 0
        %v932 = vunpack.c.l.b16 %v880
        %v933 = vunpack.c.l.b16 %v881
        %v934 = vunpack.c.l.b16 %v882
        %v935 = vunpack.c.l.b16 %v883
        %v936 = vpack.c.b16 %v933, %v932
        %v937 = vpack.c.b16 %v935, %v934
        %vm940 = vcmask 261120
        %v942 = vsel %vm940, %v879, 0
        %944 = vmatpush.bf16.msra.mxu0 0
        %945 = vmatpush.bf16.msra.mxu0 0
        %946 = vmatpush.bf16.msra.mxu0 0
        %947 = vmatpush.bf16.msra.mxu0 0
        %948 = vmatpush.bf16.msra.mxu0 0
        %949 = vmatpush.bf16.msra.mxu0 0
        %950 = vmatpush.bf16.msra.mxu0 %v937
        %951 = vmatpush.bf16.msra.mxu0 %v936
        %952 = vmatmul.bf16.gmra.mxu0 %v942
        %v953 = vpop.f32.mrf.mxu0
        %v954 = vadd.f32 %v916, %v953
        %v955 = vpop.f32.mrf.mxu0
        %956 = vdwg.mxu0
        %v961 = vunpack.c.l.b16 %v884
        %v962 = vunpack.c.l.b16 %v885
        %v963 = vunpack.c.l.b16 %v886
        %v964 = vunpack.c.l.b16 %v887
        %v965 = vpack.c.b16 %v962, %v961
        %v966 = vpack.c.b16 %v964, %v963
        %969 = vmatpush.bf16.msra.mxu0 0
        %970 = vmatpush.bf16.msra.mxu0 0
        %971 = vmatpush.bf16.msra.mxu0 0
        %972 = vmatpush.bf16.msra.mxu0 0
        %973 = vmatpush.bf16.msra.mxu0 0
        %974 = vmatpush.bf16.msra.mxu0 0
        %975 = vmatpush.bf16.msra.mxu0 %v966
        %976 = vmatpush.bf16.msra.mxu0 %v965
        %977 = vmatmul.bf16.gmra.mxu0 %v942
        %v978 = vpop.f32.mrf.mxu0
        %v979 = vadd.f32 %v917, %v978
        %v980 = vpop.f32.mrf.mxu0
        %981 = vdwg.mxu0
        %v986 = vunpack.c.l.b16 %v888
        %v987 = vunpack.c.l.b16 %v889
        %v988 = vunpack.c.l.b16 %v890
        %v989 = vunpack.c.l.b16 %v891
        %v990 = vpack.c.b16 %v987, %v986
        %v991 = vpack.c.b16 %v989, %v988
        %994 = vmatpush.bf16.msra.mxu0 0
        %995 = vmatpush.bf16.msra.mxu0 0
        %996 = vmatpush.bf16.msra.mxu0 0
        %997 = vmatpush.bf16.msra.mxu0 0
        %998 = vmatpush.bf16.msra.mxu0 0
        %999 = vmatpush.bf16.msra.mxu0 0
        %1000 = vmatpush.bf16.msra.mxu0 %v991
        %1001 = vmatpush.bf16.msra.mxu0 %v990
        %1002 = vmatmul.bf16.gmra.mxu0 %v942
        %v1003 = vpop.f32.mrf.mxu0
        %v1004 = vadd.f32 %v918, %v1003
        %v1005 = vpop.f32.mrf.mxu0
        %1006 = vdwg.mxu0
        %v1011 = vunpack.c.l.b16 %v892
        %v1012 = vunpack.c.l.b16 %v893
        %v1013 = vunpack.c.l.b16 %v894
        %v1014 = vunpack.c.l.b16 %v895
        %v1015 = vpack.c.b16 %v1012, %v1011
        %v1016 = vpack.c.b16 %v1014, %v1013
        %1019 = vmatpush.bf16.msra.mxu0 0
        %1020 = vmatpush.bf16.msra.mxu0 0
        %1021 = vmatpush.bf16.msra.mxu0 0
        %1022 = vmatpush.bf16.msra.mxu0 0
        %1023 = vmatpush.bf16.msra.mxu0 0
        %1024 = vmatpush.bf16.msra.mxu0 0
        %1025 = vmatpush.bf16.msra.mxu0 %v1016
        %1026 = vmatpush.bf16.msra.mxu0 %v1015
        %1027 = vmatmul.bf16.gmra.mxu0 %v942
        %v1028 = vpop.f32.mrf.mxu0
        %v1029 = vadd.f32 %v919, %v1028
        %v1030 = vpop.f32.mrf.mxu0
        %1031 = vdwg.mxu0
        %v1036 = vunpack.c.l.b16 %v896
        %v1037 = vunpack.c.l.b16 %v897
        %v1038 = vunpack.c.l.b16 %v898
        %v1039 = vunpack.c.l.b16 %v899
        %v1040 = vpack.c.b16 %v1037, %v1036
        %v1041 = vpack.c.b16 %v1039, %v1038
        %1044 = vmatpush.bf16.msra.mxu0 0
        %1045 = vmatpush.bf16.msra.mxu0 0
        %1046 = vmatpush.bf16.msra.mxu0 0
        %1047 = vmatpush.bf16.msra.mxu0 0
        %1048 = vmatpush.bf16.msra.mxu0 0
        %1049 = vmatpush.bf16.msra.mxu0 0
        %1050 = vmatpush.bf16.msra.mxu0 %v1041
        %1051 = vmatpush.bf16.msra.mxu0 %v1040
        %1052 = vmatmul.bf16.gmra.mxu0 %v942
        %v1053 = vpop.f32.mrf.mxu0
        %v1054 = vadd.f32 %v920, %v1053
        %v1055 = vpop.f32.mrf.mxu0
        %1056 = vdwg.mxu0
        %v1061 = vunpack.c.l.b16 %v900
        %v1062 = vunpack.c.l.b16 %v901
        %v1063 = vunpack.c.l.b16 %v902
        %v1064 = vunpack.c.l.b16 %v903
        %v1065 = vpack.c.b16 %v1062, %v1061
        %v1066 = vpack.c.b16 %v1064, %v1063
        %1069 = vmatpush.bf16.msra.mxu0 0
        %1070 = vmatpush.bf16.msra.mxu0 0
        %1071 = vmatpush.bf16.msra.mxu0 0
        %1072 = vmatpush.bf16.msra.mxu0 0
        %1073 = vmatpush.bf16.msra.mxu0 0
        %1074 = vmatpush.bf16.msra.mxu0 0
        %1075 = vmatpush.bf16.msra.mxu0 %v1066
        %1076 = vmatpush.bf16.msra.mxu0 %v1065
        %1077 = vmatmul.bf16.gmra.mxu0 %v942
        %v1078 = vpop.f32.mrf.mxu0
        %v1079 = vadd.f32 %v921, %v1078
        %v1080 = vpop.f32.mrf.mxu0
        %1081 = vdwg.mxu0
        %v1082 = vpack.c.bf16 %v954, %v954
        %v1083 = vpack.c.bf16 %v979, %v979
        %v1084 = vpack.c.bf16 %v1004, %v1004
        %v1085 = vpack.c.bf16 %v1029, %v1029
        %vm1086 = vcmask 130048
        %v1088 = vsel %vm1086, %v1082, 0
        %v1091 = vsel %vm1086, %v1084, 0
        %1093 = vmatpush.bf16.xpose.msra.mxu0 0
        %1094 = vmatpush.bf16.xpose.msra.mxu0 0
        %1095 = vmatpush.bf16.xpose.msra.mxu0 0
        %1096 = vmatpush.bf16.xpose.msra.mxu0 0
        %1097 = vmatpush.bf16.xpose.msra.mxu0 0
        %1098 = vmatpush.bf16.xpose.msra.mxu0 0
        %1099 = vmatpush.bf16.xpose.msra.mxu0 0
        %1100 = vmatpush.bf16.xpose.msra.mxu0 %v1091
        %1101 = vmatmul.bf16.gmra.mxu0 %v1088
        %v1102 = vpop.f32.mrf.mxu0
        %v1103 = vadd.f32 0.0, %v1102
        %v1104 = vpop.f32.mrf.mxu0
        %1105 = vdwg.mxu0
        %v1107 = vsel %vm1086, %v1083, 0
        %v1110 = vsel %vm1086, %v1085, 0
        %1112 = vmatpush.bf16.xpose.msra.mxu0 0
        %1113 = vmatpush.bf16.xpose.msra.mxu0 0
        %1114 = vmatpush.bf16.xpose.msra.mxu0 0
        %1115 = vmatpush.bf16.xpose.msra.mxu0 0
        %1116 = vmatpush.bf16.xpose.msra.mxu0 0
        %1117 = vmatpush.bf16.xpose.msra.mxu0 0
        %1118 = vmatpush.bf16.xpose.msra.mxu0 0
        %1119 = vmatpush.bf16.xpose.msra.mxu0 %v1110
        %1120 = vmatmul.bf16.gmra.mxu0 %v1107
        %v1121 = vpop.f32.mrf.mxu0
        %v1122 = vadd.f32 0.0, %v1121
        %v1123 = vpop.f32.mrf.mxu0
        %1124 = vdwg.mxu0
        %v1125 = vmul.f32 %v1103, 0.25
        %v1126 = vmul.f32 %v1122, 0.25
        %v1127 = vld [vmem:[%s785] sm:$0x1]
        %v1129 = vperm.slane %v1127, 0
        %v1131 = vadd.f32 %v1125, %v1129
        %v1132 = vadd.f32 %v1126, %v1129
        %vm1133 = vcmask 64512
        %v1134 = vsel %vm1133, %v1131, -inf
        %1135 = vmax.xlane.f32.xlu0 %v1134
        %v1136 = vpop.xlane.xlu0 %1135
        %v1137 = vsel %vm1133, %v1132, -inf
        %1138 = vmax.xlane.f32.xlu0 %v1137
        %v1139 = vpop.xlane.xlu0 %1138
        %v1140 = vsub.f32 %v1131, %v1136
        %v1141 = vsub.f32 %v1132, %v1139
        %v1142 = vmul.f32 %v1140, 1.442695
        %v1143 = vpow.pop %v1142
        %v1144 = vmul.f32 %v1141, 1.442695
        %v1145 = vpow.pop %v1144
        %v1146 = vsel %vm1133, %v1143, 0.0
        %1147 = vadd.xlane.f32.xlu0 %v1146
        %v1148 = vpop.xlane.xlu0 %1147
        %v1149 = vsel %vm1133, %v1145, 0.0
        %1150 = vadd.xlane.f32.xlu0 %v1149
        %v1151 = vpop.xlane.xlu0 %1150
        %v1152 = vrcp.pop %v1148
        %v1153 = vrcp.pop %v1151
        %v1154 = vmul.f32 %v1143, %v1152
        %v1155 = vmul.f32 %v1145, %v1153
        %v1156 = vpack.c.bf16 %v1154, %v1154
        %v1157 = vpack.c.bf16 %v1155, %v1155
        %v1158 = vpack.c.bf16 %v1054, %v1054
        %v1159 = vpack.c.bf16 %v1079, %v1079
        %v1161 = vsel %vm1133, %v1156, 0
        %vm1163 = vcmask 1043456
        %v1165 = vsel %vm1163, %v1158, 0
        %1167 = vmatpush.bf16.msra.mxu0 0
        %1168 = vmatpush.bf16.msra.mxu0 0
        %1169 = vmatpush.bf16.msra.mxu0 0
        %1170 = vmatpush.bf16.msra.mxu0 0
        %1171 = vmatpush.bf16.msra.mxu0 0
        %1172 = vmatpush.bf16.msra.mxu0 0
        %1173 = vmatpush.bf16.msra.mxu0 0
        %1174 = vmatpush.bf16.msra.mxu0 %v1165
        %1175 = vmatmul.bf16.gmra.mxu0 %v1161
        %v1176 = vpop.f32.mrf.mxu0
        %v1177 = vadd.f32 0.0, %v1176
        %v1178 = vpop.f32.mrf.mxu0
        %1179 = vdwg.mxu0
        %v1181 = vsel %vm1133, %v1157, 0
        %v1184 = vsel %vm1163, %v1159, 0
        %1186 = vmatpush.bf16.msra.mxu0 0
        %1187 = vmatpush.bf16.msra.mxu0 0
        %1188 = vmatpush.bf16.msra.mxu0 0
        %1189 = vmatpush.bf16.msra.mxu0 0
        %1190 = vmatpush.bf16.msra.mxu0 0
        %1191 = vmatpush.bf16.msra.mxu0 0
        %1192 = vmatpush.bf16.msra.mxu0 0
        %1193 = vmatpush.bf16.msra.mxu0 %v1184
        %1194 = vmatmul.bf16.gmra.mxu0 %v1181
        %v1195 = vpop.f32.mrf.mxu0
        %v1196 = vadd.f32 0.0, %v1195
        %v1197 = vpop.f32.mrf.mxu0
        %1198 = vdwg.mxu0
        %v1199 = vpack.c.bf16 %v1177, %v1177
        %v1200 = vpack.c.bf16 %v1196, %v1196
        %v1201 = vld [vmem:[%s799] sm:$0xf]
        %v1202 = vld [vmem:[%s799 + $0x4] sm:$0xf]
        %v1203 = vld [vmem:[%s799 + $0x8] sm:$0xf]
        %v1204 = vld [vmem:[%s799 + $0xc] sm:$0xf]
        %v1207 = vunpack.c.l.b16 %v1201
        %v1208 = vunpack.c.l.b16 %v1202
        %v1209 = vpack.c.b16 %v1208, %v1207
        %v1212 = vsel %vm1086, %v1199, 0
        %1214 = vmatpush.bf16.msra.mxu0 0
        %1215 = vmatpush.bf16.msra.mxu0 0
        %1216 = vmatpush.bf16.msra.mxu0 0
        %1217 = vmatpush.bf16.msra.mxu0 0
        %1218 = vmatpush.bf16.msra.mxu0 0
        %1219 = vmatpush.bf16.msra.mxu0 0
        %1220 = vmatpush.bf16.msra.mxu0 0
        %1221 = vmatpush.bf16.msra.mxu0 %v1209
        %1222 = vmatmul.bf16.gmra.mxu0 %v1212
        %v1223 = vpop.f32.mrf.mxu0
        %v1224 = vadd.f32 0.0, %v1223
        %v1225 = vpop.f32.mrf.mxu0
        %1226 = vdwg.mxu0
        %v1229 = vunpack.c.l.b16 %v1203
        %v1230 = vunpack.c.l.b16 %v1204
        %v1231 = vpack.c.b16 %v1230, %v1229
        %v1234 = vsel %vm1086, %v1200, 0
        %1236 = vmatpush.bf16.msra.mxu0 0
        %1237 = vmatpush.bf16.msra.mxu0 0
        %1238 = vmatpush.bf16.msra.mxu0 0
        %1239 = vmatpush.bf16.msra.mxu0 0
        %1240 = vmatpush.bf16.msra.mxu0 0
        %1241 = vmatpush.bf16.msra.mxu0 0
        %1242 = vmatpush.bf16.msra.mxu0 0
        %1243 = vmatpush.bf16.msra.mxu0 %v1231
        %1244 = vmatmul.bf16.gmra.mxu0 %v1234
        %v1245 = vpop.f32.mrf.mxu0
        %v1246 = vadd.f32 0.0, %v1245
        %v1247 = vpop.f32.mrf.mxu0
        %1248 = vdwg.mxu0
        %v1249 = vsel %vm940, %v1224, 0.0
        %v1250 = vsel %vm940, %v1246, 0.0
        %v1251 = vadd.f32 %v1249, %v1250
        %v1252 = vld [vmem:[%s802] sm:$0x1]
        %v1254 = vperm.slane %v1252, 0
        %v1256 = vadd.f32 %v1251, %v1254
        %v1257 = vadd.f32 %v1256, %v878
        %v1258 = vld [vmem:[%s805] sm:$0x1]
        %v1259 = vld [vmem:[%s808] sm:$0x1]
        %v1260 = vsel %vm940, %v1257, 0.0
        %1261 = vadd.xlane.f32.xlu0 %v1260
        %v1262 = vpop.xlane.xlu0 %1261
        %v1263 = vrcp.pop 32.0
        %v1264 = vmul.f32 32.0, %v1263
        %v1265 = vsub.f32 1.0, %v1264
        %v1266 = vmul.f32 %v1263, %v1265
        %v1267 = vadd.f32 %v1263, %v1266
        %vm1268 = vweird.f32 %v1263
        %v1269 = vsel %vm1268, %v1263, %v1267
        %v1270 = vmul.f32 %v1262, %v1269
        %v1271 = vsub.f32 %v1257, %v1270
        %v1272 = vmul.f32 %v1271, %v1271
        %v1273 = vsel %vm940, %v1272, 0.0
        %1274 = vadd.xlane.f32.xlu0 %v1273
        %v1275 = vpop.xlane.xlu0 %1274
        %v1276 = vmul.f32 %v1275, %v1269
        %v1277 = vadd.f32 %v1276, 1e-12
        %v1278 = vrsqrt.pop %v1277
        %v1279 = vmul.f32 %v1278, %v1277
        %v1280 = vmul.f32 %v1279, %v1278
        %v1281 = vmul.f32 0.5, %v1280
        %v1282 = vsub.f32 1.5, %v1281
        %v1283 = vmul.f32 %v1278, %v1282
        %vm1284 = vweird.f32 %v1277
        %vm1285 = vweird.f32 %v1278
        %vm1286 = vmor %vm1284, %vm1285
        %v1287 = vsel %vm1286, %v1278, %v1283
        %v1288 = vmul.f32 %v1271, %v1287
        %v1290 = vperm.slane %v1258, 0
        %v1292 = vmul.f32 %v1288, %v1290
        %v1294 = vperm.slane %v1259, 0
        %v1296 = vadd.f32 %v1292, %v1294
        %v1297 = vpack.c.bf16 %v1296, %v1296
        %v1298 = vld [vmem:[%s813] sm:$0xf]
        %v1299 = vld [vmem:[%s813 + $0x4] sm:$0xf]
        %v1300 = vld [vmem:[%s813 + $0x8] sm:$0xf]
        %v1301 = vld [vmem:[%s813 + $0xc] sm:$0xf]
        %v1302 = vld [vmem:[%s816] sm:$0x1]
        %v1304 = vperm.slane %v1302, 0
        %v1310 = vunpack.c.l.b16 %v1298
        %v1311 = vunpack.c.l.b16 %v1299
        %v1312 = vunpack.c.l.b16 %v1300
        %v1313 = vunpack.c.l.b16 %v1301
        %v1314 = vpack.c.b16 %v1311, %v1310
        %v1315 = vpack.c.b16 %v1313, %v1312
        %v1319 = vsel %vm940, %v1297, 0
        %1321 = vmatpush.bf16.msra.mxu0 0
        %1322 = vmatpush.bf16.msra.mxu0 0
        %1323 = vmatpush.bf16.msra.mxu0 0
        %1324 = vmatpush.bf16.msra.mxu0 0
        %1325 = vmatpush.bf16.msra.mxu0 0
        %1326 = vmatpush.bf16.msra.mxu0 0
        %1327 = vmatpush.bf16.msra.mxu0 %v1315
        %1328 = vmatpush.bf16.msra.mxu0 %v1314
        %1329 = vmatmul.bf16.gmra.mxu0 %v1319
        %v1330 = vpop.f32.mrf.mxu0
        %v1331 = vadd.f32 %v1304, %v1330
        %v1332 = vpop.f32.mrf.mxu0
        %1333 = vdwg.mxu0
        %v1334 = vmul.f32 %v1331, 0.5
        %v1335 = vmul.f32 %v1331, 0.044715
        %v1336 = vmul.f32 %v1335, %v1331
        %v1337 = vmul.f32 %v1336, %v1331
        %v1338 = vadd.f32 %v1331, %v1337
        %v1339 = vmul.f32 %v1338, 0.7978846
        %v1340 = vtanh.pop %v1339
        %v1341 = vadd.f32 %v1340, 1.0
        %v1342 = vmul.f32 %v1334, %v1341
        %v1343 = vpack.c.bf16 %v1342, %v1342
        %v1344 = vld [vmem:[%s821] sm:$0xf]
        %v1345 = vld [vmem:[%s821 + $0x4] sm:$0xf]
        %v1346 = vld [vmem:[%s821 + $0x8] sm:$0xf]
        %v1347 = vld [vmem:[%s821 + $0xc] sm:$0xf]
        %v1348 = vld [vmem:[%s821 + $0x10] sm:$0xf]
        %v1349 = vld [vmem:[%s821 + $0x14] sm:$0xf]
        %v1350 = vld [vmem:[%s821 + $0x18] sm:$0xf]
        %v1351 = vld [vmem:[%s821 + $0x1c] sm:$0xf]
        %v1352 = vld [vmem:[%s824] sm:$0x1]
        %v1354 = vperm.slane %v1352, 0
        %v1364 = vunpack.c.l.b16 %v1344
        %v1365 = vunpack.c.l.b16 %v1345
        %v1366 = vunpack.c.l.b16 %v1346
        %v1367 = vunpack.c.l.b16 %v1347
        %v1368 = vunpack.c.l.b16 %v1348
        %v1369 = vunpack.c.l.b16 %v1349
        %v1370 = vunpack.c.l.b16 %v1350
        %v1371 = vunpack.c.l.b16 %v1351
        %v1372 = vpack.c.b16 %v1365, %v1364
        %v1373 = vpack.c.b16 %v1367, %v1366
        %v1374 = vpack.c.b16 %v1369, %v1368
        %v1375 = vpack.c.b16 %v1371, %v1370
        %vm1380 = vcmask 523264
        %v1382 = vsel %vm1380, %v1343, 0
        %1384 = vmatpush.bf16.msra.mxu0 0
        %1385 = vmatpush.bf16.msra.mxu0 0
        %1386 = vmatpush.bf16.msra.mxu0 0
        %1387 = vmatpush.bf16.msra.mxu0 0
        %1388 = vmatpush.bf16.msra.mxu0 %v1375
        %1389 = vmatpush.bf16.msra.mxu0 %v1374
        %1390 = vmatpush.bf16.msra.mxu0 %v1373
        %1391 = vmatpush.bf16.msra.mxu0 %v1372
        %1392 = vmatmul.bf16.gmra.mxu0 %v1382
        %v1393 = vpop.f32.mrf.mxu0
        %v1394 = vadd.f32 %v1354, %v1393
        %v1395 = vpop.f32.mrf.mxu0
        %1396 = vdwg.mxu0
        %v1397 = vadd.f32 %v1394, %v1296
        %v1398 = vld [vmem:[%s827] sm:$0x1]
        %v1399 = vld [vmem:[%s830] sm:$0x1]
        %v1400 = vsel %vm940, %v1397, 0.0
        %1401 = vadd.xlane.f32.xlu0 %v1400
        %v1402 = vpop.xlane.xlu0 %1401
        %v1403 = vmul.f32 %v1402, %v1269
        %v1404 = vsub.f32 %v1397, %v1403
        %v1405 = vmul.f32 %v1404, %v1404
        %v1406 = vsel %vm940, %v1405, 0.0
        %1407 = vadd.xlane.f32.xlu0 %v1406
        %v1408 = vpop.xlane.xlu0 %1407
        %v1409 = vmul.f32 %v1408, %v1269
        %v1410 = vadd.f32 %v1409, 1e-12
        %v1411 = vrsqrt.pop %v1410
        %v1412 = vmul.f32 %v1411, %v1410
        %v1413 = vmul.f32 %v1412, %v1411
        %v1414 = vmul.f32 0.5, %v1413
        %v1415 = vsub.f32 1.5, %v1414
        %v1416 = vmul.f32 %v1411, %v1415
        %vm1417 = vweird.f32 %v1410
        %vm1418 = vweird.f32 %v1411
        %vm1419 = vmor %vm1417, %vm1418
        %v1420 = vsel %vm1419, %v1411, %v1416
        %v1421 = vmul.f32 %v1404, %v1420
        %v1423 = vperm.slane %v1398, 0
        %v1425 = vmul.f32 %v1421, %v1423
        %v1427 = vperm.slane %v1399, 0
        %v1429 = vadd.f32 %v1425, %v1427
        %1430 = vst.msk [vmem:[#allocation2] sm:$0xff] %vm940, %v1429
        %1431 = vst.msk [vmem:[%s772] sm:$0xff] %vm940, %v1429
        %p1432 = scmp.eq.s32.totalorder %s42, 1
        // Predicated region
        $region97: #{tpu_custom_call.1} parent=91 // pred_check
          %p1433 = pneg %p1432
        $region98: #{tpu_custom_call.1} parent=91 // pred_check_branch
          %1435 = sbr.rel (%p1433) target = $region100
        $region99: #{tpu_custom_call.1} parent=91 // pred_region
          %v1436 = vpack.c.bf16 %v1429, %v1429
          %v1437 = vld [vmem:[%s4] sm:$0xf]
          %v1438 = vld [vmem:[%s4 + $0x4] sm:$0xf]
          %v1439 = vld [vmem:[%s4 + $0x8] sm:$0xf]
          %v1440 = vld [vmem:[%s4 + $0xc] sm:$0xf]
          %v1441 = vld [vmem:[%s5] sm:$0x1]
          %v1446 = vunpack.c.l.b16 %v1437
          %v1447 = vunpack.c.l.b16 %v1438
          %v1448 = vunpack.c.l.b16 %v1439
          %v1449 = vunpack.c.l.b16 %v1440
          %v1450 = vpack.c.b16 %v1447, %v1446
          %v1451 = vpack.c.b16 %v1449, %v1448
          %v1455 = vsel %vm940, %v1436, 0
          %1457 = vmatpush.bf16.msra.mxu0 0
          %1458 = vmatpush.bf16.msra.mxu0 0
          %1459 = vmatpush.bf16.msra.mxu0 0
          %1460 = vmatpush.bf16.msra.mxu0 0
          %1461 = vmatpush.bf16.msra.mxu0 0
          %1462 = vmatpush.bf16.msra.mxu0 0
          %1463 = vmatpush.bf16.msra.mxu0 %v1451
          %1464 = vmatpush.bf16.msra.mxu0 %v1450
          %1465 = vmatmul.bf16.gmra.mxu0 %v1455
          %v1466 = vpop.f32.mrf.mxu0
          %v1467 = vadd.f32 %v1441, %v1466
          %v1468 = vpop.f32.mrf.mxu0
          %1469 = vdwg.mxu0
          %v1470 = vtanh.pop %v1467
          %vm1471 = vcmask 253952
          %1472 = vst.msk [vmem:[%s778] sm:$0x1] %vm1471, %v1470
        $region100: #{tpu_custom_call.1} parent=91 // pred_fallthru
          _
        %s1473 = sand.u32 %s507, 1
        %s1474 = scalar_lea.sflag [#allocation4], %s1473
        %s1475 = sand.u32 %s507, 1
        %s1476 = smul.addr %s1475, 8
        %s1477 = scalar_lea.vmem [#allocation3], %s1476
        %s1478 = sand.u32 %s533, 1
        %s1479 = scalar_lea.sflag [#allocation6], %s1478
        %s1480 = sand.u32 %s533, 1
        %s1481 = scalar_lea.vmem [#allocation5], %s1480
        // Predicated region
        $region101: #{tpu_custom_call.1} parent=91 // pred_check
          %p1482 = pneg %p517
        $region102: #{tpu_custom_call.1} parent=91 // pred_check_branch
          %1484 = sbr.rel (%p1482) target = $region104
        $region103: #{tpu_custom_call.1} parent=91 // pred_region
          %1486 = vsyncadd %s1474, 0
          %s1487 = smul.addr %s42, 2
          %s1488 = sadd.s32 %s41, %s1487
          %s1489 = smul.addr %s1488, 8
          %s1490 = scalar_lea.hbm %s18, %s1489
          %s1492 = sshll.u32 %s1477, 4
          %s1493 = int_to_ptr.vmem [resolvable:$true] %s1492
          %s1494 = sshll.u32 %s1490, 4
          %s1495 = int_to_ptr.hbm [resolvable:$true] %s1494
          %1497 = dma.vmem_to_hbm [thread:$0]  %s1493, 128, %s1495, %s1474
        $region104: #{tpu_custom_call.1} parent=91 // pred_fallthru
          _
        // Predicated region
        $region105: #{tpu_custom_call.1} parent=91 // pred_check
          %p1498 = pneg %p543
        $region106: #{tpu_custom_call.1} parent=91 // pred_check_branch
          %1500 = sbr.rel (%p1498) target = $region108
        $region107: #{tpu_custom_call.1} parent=91 // pred_region
          %1502 = vsyncadd %s1479, 0
          %s1503 = scalar_lea.hbm %s19, %s41
          %s1505 = sshll.u32 %s1481, 4
          %s1506 = int_to_ptr.vmem [resolvable:$true] %s1505
          %s1507 = sshll.u32 %s1503, 4
          %s1508 = int_to_ptr.hbm [resolvable:$true] %s1507
          %1510 = dma.vmem_to_hbm [thread:$0]  %s1506, 16, %s1508, %s1479
        $region108: #{tpu_custom_call.1} parent=91 // pred_fallthru
          _
      $region92: #{tpu_custom_call.1} parent=5 // pred_fallthru
        _
      %p1511 = scmp.le.s32.totalorder 2, %s32
      // Predicated region
      $region109: #{tpu_custom_call.1} parent=5 // pred_check
        %p1512 = pneg %p1511
      $region110: #{tpu_custom_call.1} parent=5 // pred_check_branch
        %1514 = sbr.rel (%p1512) target = $region112
      $region111: #{tpu_custom_call.1} parent=5 // pred_region
        %s1515 = ssub.s32 %s32, 2
        // Predicated region
        $region113: #{tpu_custom_call.1} parent=111 // pred_check
          %p1516 = pneg %p523
        $region114: #{tpu_custom_call.1} parent=111 // pred_check_branch
          %1518 = sbr.rel (%p1516) target = $region116
        $region115: #{tpu_custom_call.1} parent=111 // pred_region
          %s1519 = sand.u32 %s508, 1
          %s1520 = scalar_lea.sflag [#allocation4], %s1519
          %s1521 = sand.u32 %s508, 1
          %s1522 = smul.addr %s1521, 8
          %s1523 = scalar_lea.vmem [#allocation3], %s1522
          %1525 = dma.done %s1520, 128
        $region116: #{tpu_custom_call.1} parent=111 // pred_fallthru
          _
        // Predicated region
        $region117: #{tpu_custom_call.1} parent=111 // pred_check
          %p1526 = pneg %p549
        $region118: #{tpu_custom_call.1} parent=111 // pred_check_branch
          %1528 = sbr.rel (%p1526) target = $region120
        $region119: #{tpu_custom_call.1} parent=111 // pred_region
          %s1529 = sand.u32 %s534, 1
          %s1530 = scalar_lea.sflag [#allocation6], %s1529
          %s1531 = sand.u32 %s534, 1
          %s1532 = scalar_lea.vmem [#allocation5], %s1531
          %1534 = dma.done %s1530, 16
        $region120: #{tpu_custom_call.1} parent=111 // pred_fallthru
          _
      $region112: #{tpu_custom_call.1} parent=5 // pred_fallthru
        _
    $region6: #{tpu_custom_call.1} parent=1 // loop_footer
      %s36 = sadd.s32 1, %s32
    $region7: #{tpu_custom_call.1} parent=1 // loop_footer_branch
      %31 = sbr.rel target = $region3
    $region8: #{tpu_custom_call.1} parent=1 // loop_exit
      _
    %1535 = vsyncpa [#allocation4], 1
    %s1536 = scalar_lea.sflag [#allocation4], 1
    %1537 = vsyncpa %s1536, 1
    %1538 = vsyncpa [#allocation6], 1
    %s1539 = scalar_lea.sflag [#allocation6], 1
    %1540 = vsyncpa %s1539, 1

</llo_original>
